<compile_context>
chip_gen: v7x
topology: tpu7x:2x2x1
jax: 0.10.0
libtpu: 0.0.40
codegen_flags: <defaults>
</compile_context>

<pallas_src>
import jax
import jax.numpy as jnp
from jax import lax
from jax.experimental import pallas as pl
from jax.experimental.pallas import tpu as pltpu


# ----------------------------------------------------------------------------
# Fused Pallas kernel
# ----------------------------------------------------------------------------
def _make_fused_kernel(num_heads, head_dim, tq, n_k, has_mask,
                       exact_softmax_recip=False):
    def kernel(q_ref, k_ref, v_ref, *rest):
        if has_mask:
            bias_ref, *rest = rest
        (wq_ref, bq_ref, wk_ref, bk_ref, wv_ref, bv_ref, wp_ref, bp_ref,
         o_ref, kh_ref, vh_ref) = rest

        # --- K/V projections: once per batch (first q tile), kept resident ---
        @pl.when(pl.program_id(1) == 0)
        def _():
            kh = (jnp.dot(k_ref[...], wk_ref[...],
                          preferred_element_type=jnp.float32) + bk_ref[...])
            kh_ref[...] = kh.astype(kh_ref.dtype)
            vh = (jnp.dot(v_ref[...], wv_ref[...],
                          preferred_element_type=jnp.float32) + bv_ref[...])
            vh_ref[...] = vh.astype(vh_ref.dtype)

        # --- Q projection for this q tile (bf16 operands, f32 accumulation) ---
        qh = (jnp.dot(q_ref[...], wq_ref[...],
                      preferred_element_type=jnp.float32)
              + bq_ref[...]).astype(jnp.bfloat16)           # (tq, C)

        if has_mask:
            # Hoisted out of the statically-unrolled head loop (JAX does not
            # CSE broadcast_in_dim).
            bias = jnp.broadcast_to(bias_ref[...], (tq, n_k))

        d = head_dim
        ctx_parts = []
        for h in range(num_heads):                           # static unroll
            sl = slice(h * d, (h + 1) * d)
            # scores: contract last dims of both (no explicit K transpose).
            s = lax.dot_general(qh[:, sl], kh_ref[:, sl],
                                (((1,), (1,)), ((), ())),
                                preferred_element_type=jnp.float32)
            if has_mask:
                s = s + bias                                 # {0, -inf} bias

            # softmax over keys, f32 statistics.  (Fully-masked rows give NaN,
            # matching the PyTorch reference.)
            m = jnp.max(s, axis=-1, keepdims=True)
            p = jnp.exp(s - m)
            denom = jnp.sum(p, axis=-1, keepdims=True)
            if exact_softmax_recip:
                p = p / denom
            else:
                p = p * pl.reciprocal(denom, approx=True)    # EUP, off VALU path

            ctx_parts.append(jnp.dot(p.astype(jnp.bfloat16), vh_ref[:, sl],
                                     preferred_element_type=jnp.float32))

        # One lane-dense (tq, C) tile instead of H masked sub-128-lane stores.
        ctx = jnp.concatenate(ctx_parts, axis=-1).astype(jnp.bfloat16)

        out = (jnp.dot(ctx, wp_ref[...], preferred_element_type=jnp.float32)
               + bp_ref[...])
        o_ref[...] = out.astype(o_ref.dtype)

    return kernel


def fused_mhsa(q, k, v, wq, bq, wk, bk, wv, bv, wp, bp, *, num_heads,
               bias=None, out_dtype=jnp.float32, q_tile=128,
               exact_softmax_recip=False):
    """Fused attention forward.  q/k/v: (B, N, C) batch-first bf16 -> (B, N_q, C)."""
    B, N_q, C = q.shape
    N_k = k.shape[1]
    d = C // num_heads
    tq = N_q if N_q <= q_tile else q_tile
    n_qt = pl.cdiv(N_q, tq)
    has_mask = bias is not None
    kernel = _make_fused_kernel(num_heads, d, tq, N_k, has_mask,
                                exact_softmax_recip=exact_softmax_recip)

    in_specs = [
        pl.BlockSpec((pl.Squeezed(), tq, C), lambda b, qt: (b, qt, 0)),
        pl.BlockSpec((pl.Squeezed(), N_k, C), lambda b, qt: (b, 0, 0)),
        pl.BlockSpec((pl.Squeezed(), N_k, C), lambda b, qt: (b, 0, 0)),
    ]
    args = [q, k, v]
    if has_mask:
        in_specs.append(pl.BlockSpec((1, N_k), lambda b, qt: (b, 0)))
        args.append(bias)

    # Grid-invariant bf16 weights / f32 biases: same block every step -> stay
    # resident in VMEM (only re-DMA'd when the block index changes; it never
    # does).  See TODO(synk) above re: pl.Buffered(1) at large C on v7x.
    w_spec = pl.BlockSpec((C, C), lambda b, qt: (0, 0))
    b_spec = pl.BlockSpec((1, C), lambda b, qt: (0, 0))
    in_specs += [w_spec, b_spec, w_spec, b_spec, w_spec, b_spec, w_spec, b_spec]
    args += [wq, bq.reshape(1, C), wk, bk.reshape(1, C),
             wv, bv.reshape(1, C), wp, bp.reshape(1, C)]

    # Explicit VMEM budget (double-buffered pipeline blocks + scratch + margin).
    bf2, f4 = 2, 4
    est = (2 * tq * C * bf2                 # q blocks
           + 2 * 2 * N_k * C * bf2          # k, v blocks
           + 2 * tq * C * f4                # out blocks
           + 2 * 4 * C * C * bf2            # 4 weight matrices
           + 2 * 4 * C * f4                 # 4 biases
           + 2 * N_k * C * bf2              # kh / vh scratch
           + 4 * tq * max(N_k, 128) * f4)   # transient score/prob tiles
    if has_mask:
        est += 2 * N_k * f4
    vmem_limit = int(min(100 * 2**20, max(32 * 2**20, 2 * est)))

    return pl.pallas_call(
        kernel,
        out_shape=jax.ShapeDtypeStruct((B, N_q, C), out_dtype),
        grid_spec=pltpu.PrefetchScalarGridSpec(
            num_scalar_prefetch=0,
            grid=(B, n_qt),
            in_specs=in_specs,
            out_specs=pl.BlockSpec((pl.Squeezed(), tq, C),
                                   lambda b, qt: (b, qt, 0)),
            scratch_shapes=[
                pltpu.VMEM((N_k, C), jnp.bfloat16),   # kh (resident per batch)
                pltpu.VMEM((N_k, C), jnp.bfloat16),   # vh (resident per batch)
            ],
        ),
        compiler_params=pltpu.CompilerParams(
            dimension_semantics=("parallel", "arbitrary"),
            vmem_limit_bytes=vmem_limit),
    )(*args)


# ----------------------------------------------------------------------------
# Module (forward only)
# ----------------------------------------------------------------------------
class MultiHeadSparseAttentionPallas:
    def __init__(self, dim, num_heads, key, num_patches=197):
        self.dim = dim
        self.num_heads = num_heads
        self.num_gates = dim // num_heads
        self.scale = self.num_gates ** (-0.5)
        self.num_patches = num_patches

        ks = jax.random.split(key, 8)
        init = lambda kk, shape: jax.random.normal(kk, shape, jnp.float32) * 0.02
        # nn.Linear(dim, dim) weights stored as (in, out) for x @ W.
        self.wq, self.bq = init(ks[0], (dim, dim)), init(ks[1], (dim,))
        self.wk, self.bk = init(ks[2], (dim, dim)), init(ks[3], (dim,))
        self.wv, self.bv = init(ks[4], (dim, dim)), init(ks[5], (dim,))
        self.wp, self.bp = init(ks[6], (dim, dim)), init(ks[7], (dim,))
        # zeta (default branch): (1,1,H,1,num_gates) -> stored as (H, d); ones.
        self.zeta = jnp.ones((num_heads, self.num_gates), jnp.float32)
        # patch_zeta exists in the module but is unused in forward.
        self.patch_zeta = jnp.ones((1, num_patches, 1), jnp.float32) * 3.0

    def _folded_params(self):
        # Fold zeta (per head/gate) and the softmax scale into the projection
        # weights at trace time, then cast weights to bf16.  Column h*d + g of
        # each projection output corresponds to (head h, gate g) of the
        # (B, N, H, d) reshape, so the per-column multiply is exactly the
        # post-projection zeta gating.  Mask equivalence: torch computes
        # (mask + qk^T) * scale; with mask in {0, -inf}, mask*scale == mask, so
        # folding the scale into Wq and adding the mask afterwards is identical.
        z = self.zeta.reshape(-1)                         # (C,)
        zq = z * jnp.float32(self.scale)                  # scale folded into Q
        bf = jnp.bfloat16
        return ((self.wq * zq[None, :]).astype(bf), self.bq * zq,
                (self.wk * z[None, :]).astype(bf), self.bk * z,
                (self.wv * z[None, :]).astype(bf), self.bv * z,
                self.wp.astype(bf), self.bp)

    def __call__(self, q, k, v, attn_mask=None):
        # q, k, v: (N, B, C) seq-first.  The transpose to batch-first is fused
        # by XLA with the (required) f32->bf16 cast under jit.
        qb = jnp.transpose(q, (1, 0, 2)).astype(jnp.bfloat16)
        kb = jnp.transpose(k, (1, 0, 2)).astype(jnp.bfloat16)
        vb = jnp.transpose(v, (1, 0, 2)).astype(jnp.bfloat16)
        B, N_q, C = qb.shape
        N_k = kb.shape[1]

        wq, bq, wk, bk, wv, bv, wp, bp = self._folded_params()

        bias = None
        if attn_mask is not None:
            # Key-padding mask (B, N_k): True -> masked (-inf additive bias).
            bias = jnp.where(attn_mask.reshape(B, N_k).astype(bool),
                             jnp.float32(-jnp.inf), jnp.float32(0.0))

        x = fused_mhsa(qb, kb, vb, wq, bq, wk, bk, wv, bv, wp, bp,
                       num_heads=self.num_heads, bias=bias,
                       out_dtype=jnp.float32)
        return jnp.transpose(x, (1, 0, 2))                # back to (N_q, B, C)


# ----------------------------------------------------------------------------
# Pure-JAX f32 reference (mirrors the PyTorch forward)
# ----------------------------------------------------------------------------
def reference_forward(mod, q, k, v, attn_mask=None):
    q = jnp.transpose(q, (1, 0, 2))
    k = jnp.transpose(k, (1, 0, 2))
    v = jnp.transpose(v, (1, 0, 2))
    B, N_q, C = q.shape
    N_k = k.shape[1]
    H, d = mod.num_heads, mod.num_gates
    z = mod.zeta.reshape(1, H, 1, d)

    qh = (q @ mod.wq + mod.bq).reshape(B, N_q, H, d).transpose(0, 2, 1, 3) * z
    kh = (k @ mod.wk + mod.bk).reshape(B, N_k, H, d).transpose(0, 2, 1, 3) * z
    vh = (v @ mod.wv + mod.bv).reshape(B, N_k, H, d).transpose(0, 2, 1, 3) * z

    attn = jnp.einsum("bhqd,bhkd->bhqk", qh, kh)
    if attn_mask is not None:
        bias = jnp.where(attn_mask.reshape(B, N_k).astype(bool),
                         -jnp.inf, 0.0).reshape(B, 1, 1, N_k)
        attn = attn + bias                 # torch baddbmm: add mask, then scale
    attn = attn * mod.scale
    attn = jax.nn.softmax(attn, axis=-1)
    x = jnp.einsum("bhqk,bhkd->bhqd", attn, vh)
    x = x.transpose(0, 2, 1, 3).reshape(B, N_q, C)
    x = x @ mod.wp + mod.bp
    return jnp.transpose(x, (1, 0, 2))


if __name__ == "__main__":
    key = jax.random.PRNGKey(0)
    k_param, k_q, k_k, k_v = jax.random.split(key, 4)

    B, N, C, H = 2, 8, 32, 4   # seq=8, batch=2, dim=32, heads=4 -> head_dim=8
    mod = MultiHeadSparseAttentionPallas(dim=C, num_heads=H, key=k_param,
                                         num_patches=N)

    q_in = jax.random.normal(k_q, (N, B, C), jnp.float32)
    k_in = jax.random.normal(k_k, (N, B, C), jnp.float32)
    v_in = jax.random.normal(k_v, (N, B, C), jnp.float32)

    fwd = jax.jit(lambda q, k, v: mod(q, k, v))
    fwd_masked = jax.jit(lambda q, k, v, m: mod(q, k, v, attn_mask=m))

    # Unmasked path (kernel variant specialized with no bias input).
    out = jax.block_until_ready(fwd(q_in, k_in, v_in))
    ref = reference_forward(mod, q_in, k_in, v_in, attn_mask=None)
    assert out.shape == (N, B, C)
    assert jnp.allclose(out, ref, atol=3e-3, rtol=3e-2), "unmasked mismatch"

    # Masked path: boolean key-padding mask (B, N_k); mask last 2 keys of b=1.
    mask = jnp.zeros((B, N), dtype=bool).at[1, N - 2:].set(True)
    out_m = jax.block_until_ready(fwd_masked(q_in, k_in, v_in, mask))
    ref_m = reference_forward(mod, q_in, k_in, v_in, attn_mask=mask)
    assert jnp.allclose(out_m, ref_m, atol=3e-3, rtol=3e-2), "masked mismatch"

    print("KERNEL_OK")
</pallas_src>

<mosaic_0001>
module attributes {stable_mosaic.version = 11 : i64} {
  func.func @kernel(%arg0: i32, %arg1: i32, %arg2: memref<1x8x32xbf16, #tpu.memory_space<vmem>>, %arg3: memref<1x8x32xbf16, #tpu.memory_space<vmem>>, %arg4: memref<1x8x32xbf16, #tpu.memory_space<vmem>>, %arg5: memref<32x32xbf16, #tpu.memory_space<vmem>>, %arg6: memref<1x32xf32, #tpu.memory_space<vmem>>, %arg7: memref<32x32xbf16, #tpu.memory_space<vmem>>, %arg8: memref<1x32xf32, #tpu.memory_space<vmem>>, %arg9: memref<32x32xbf16, #tpu.memory_space<vmem>>, %arg10: memref<1x32xf32, #tpu.memory_space<vmem>>, %arg11: memref<32x32xbf16, #tpu.memory_space<vmem>>, %arg12: memref<1x32xf32, #tpu.memory_space<vmem>>, %arg13: memref<1x8x32xf32, #tpu.memory_space<vmem>>, %arg14: memref<8x32xbf16, #tpu.memory_space<vmem>>, %arg15: memref<8x32xbf16, #tpu.memory_space<vmem>>) attributes {dimension_semantics = [#tpu.dimension_semantics<parallel>, #tpu.dimension_semantics<arbitrary>], iteration_bounds = array<i64: 2, 1>, scalar_prefetch = 0 : i64, scratch_operands = 2 : i64, tpu.core_type = #tpu.core_type<tc>, window_params = [{transform_indices = @transform_0, window_bounds = array<i64: 1, 8, 32>}, {transform_indices = @transform_1, window_bounds = array<i64: 1, 8, 32>}, {transform_indices = @transform_2, window_bounds = array<i64: 1, 8, 32>}, {pipeline_mode = #tpu.pipeline_mode<synchronous>, transform_indices = @transform_3, window_bounds = array<i64: 32, 32>}, {pipeline_mode = #tpu.pipeline_mode<synchronous>, transform_indices = @transform_4, window_bounds = array<i64: 1, 32>}, {pipeline_mode = #tpu.pipeline_mode<synchronous>, transform_indices = @transform_5, window_bounds = array<i64: 32, 32>}, {pipeline_mode = #tpu.pipeline_mode<synchronous>, transform_indices = @transform_6, window_bounds = array<i64: 1, 32>}, {pipeline_mode = #tpu.pipeline_mode<synchronous>, transform_indices = @transform_7, window_bounds = array<i64: 32, 32>}, {pipeline_mode = #tpu.pipeline_mode<synchronous>, transform_indices = @transform_8, window_bounds = array<i64: 1, 32>}, {pipeline_mode = #tpu.pipeline_mode<synchronous>, transform_indices = @transform_9, window_bounds = array<i64: 32, 32>}, {pipeline_mode = #tpu.pipeline_mode<synchronous>, transform_indices = @transform_10, window_bounds = array<i64: 1, 32>}, {transform_indices = @transform_11, window_bounds = array<i64: 1, 8, 32>}]} {
    %c0_i32 = arith.constant 0 : i32
    %0 = arith.cmpi eq, %arg1, %c0_i32 : i32
    %1 = arith.extui %0 : i1 to i32
    %c0_i32_0 = arith.constant 0 : i32
    %2 = arith.cmpi ne, %1, %c0_i32_0 : i32
    scf.if %2 {
      %c0_44 = arith.constant 0 : index
      %c0_45 = arith.constant 0 : index
      %c0_46 = arith.constant 0 : index
      %85 = vector.load %arg3[%c0_44, %c0_45, %c0_46] : memref<1x8x32xbf16, #tpu.memory_space<vmem>>, vector<1x8x32xbf16>
      %86 = vector.shape_cast %85 : vector<1x8x32xbf16> to vector<8x32xbf16>
      %c0_47 = arith.constant 0 : index
      %c0_48 = arith.constant 0 : index
      %87 = vector.load %arg7[%c0_47, %c0_48] : memref<32x32xbf16, #tpu.memory_space<vmem>>, vector<32x32xbf16>
      %cst_49 = arith.constant dense<0.000000e+00> : vector<8x32xf32>
      %88 = tpu.matmul %86, %87, %cst_49 {dimension_numbers = #tpu.dot_dimension_numbers<[1], [0], [0], [1], [0, 0, 1, 1], [], []>} : vector<8x32xbf16>, vector<32x32xbf16>, vector<8x32xf32> -> vector<8x32xf32>
      %c0_50 = arith.constant 0 : index
      %c0_51 = arith.constant 0 : index
      %89 = vector.load %arg8[%c0_50, %c0_51] : memref<1x32xf32, #tpu.memory_space<vmem>>, vector<1x32xf32>
      %90 = vector.broadcast %89 : vector<1x32xf32> to vector<8x32xf32>
      %91 = arith.addf %88, %90 : vector<8x32xf32>
      %92 = arith.truncf %91 : vector<8x32xf32> to vector<8x32xbf16>
      %c0_52 = arith.constant 0 : index
      %c0_53 = arith.constant 0 : index
      %93 = vector.load %arg14[%c0_52, %c0_53] : memref<8x32xbf16, #tpu.memory_space<vmem>>, vector<8x32xbf16>
      tpu.vector_store %arg14[%c0_52, %c0_53], %92 {strides = array<i32>} : memref<8x32xbf16, #tpu.memory_space<vmem>>, vector<8x32xbf16>,
      %c0_54 = arith.constant 0 : index
      %c0_55 = arith.constant 0 : index
      %c0_56 = arith.constant 0 : index
      %94 = vector.load %arg4[%c0_54, %c0_55, %c0_56] : memref<1x8x32xbf16, #tpu.memory_space<vmem>>, vector<1x8x32xbf16>
      %95 = vector.shape_cast %94 : vector<1x8x32xbf16> to vector<8x32xbf16>
      %c0_57 = arith.constant 0 : index
      %c0_58 = arith.constant 0 : index
      %96 = vector.load %arg9[%c0_57, %c0_58] : memref<32x32xbf16, #tpu.memory_space<vmem>>, vector<32x32xbf16>
      %cst_59 = arith.constant dense<0.000000e+00> : vector<8x32xf32>
      %97 = tpu.matmul %95, %96, %cst_59 {dimension_numbers = #tpu.dot_dimension_numbers<[1], [0], [0], [1], [0, 0, 1, 1], [], []>} : vector<8x32xbf16>, vector<32x32xbf16>, vector<8x32xf32> -> vector<8x32xf32>
      %c0_60 = arith.constant 0 : index
      %c0_61 = arith.constant 0 : index
      %98 = vector.load %arg10[%c0_60, %c0_61] : memref<1x32xf32, #tpu.memory_space<vmem>>, vector<1x32xf32>
      %99 = vector.broadcast %98 : vector<1x32xf32> to vector<8x32xf32>
      %100 = arith.addf %97, %99 : vector<8x32xf32>
      %101 = arith.truncf %100 : vector<8x32xf32> to vector<8x32xbf16>
      %c0_62 = arith.constant 0 : index
      %c0_63 = arith.constant 0 : index
      %102 = vector.load %arg15[%c0_62, %c0_63] : memref<8x32xbf16, #tpu.memory_space<vmem>>, vector<8x32xbf16>
      tpu.vector_store %arg15[%c0_62, %c0_63], %101 {strides = array<i32>} : memref<8x32xbf16, #tpu.memory_space<vmem>>, vector<8x32xbf16>,
    } else {
    }
    %c0 = arith.constant 0 : index
    %c0_1 = arith.constant 0 : index
    %c0_2 = arith.constant 0 : index
    %3 = vector.load %arg2[%c0, %c0_1, %c0_2] : memref<1x8x32xbf16, #tpu.memory_space<vmem>>, vector<1x8x32xbf16>
    %4 = vector.shape_cast %3 : vector<1x8x32xbf16> to vector<8x32xbf16>
    %c0_3 = arith.constant 0 : index
    %c0_4 = arith.constant 0 : index
    %5 = vector.load %arg5[%c0_3, %c0_4] : memref<32x32xbf16, #tpu.memory_space<vmem>>, vector<32x32xbf16>
    %cst = arith.constant dense<0.000000e+00> : vector<8x32xf32>
    %6 = tpu.matmul %4, %5, %cst {dimension_numbers = #tpu.dot_dimension_numbers<[1], [0], [0], [1], [0, 0, 1, 1], [], []>} : vector<8x32xbf16>, vector<32x32xbf16>, vector<8x32xf32> -> vector<8x32xf32>
    %c0_5 = arith.constant 0 : index
    %c0_6 = arith.constant 0 : index
    %7 = vector.load %arg6[%c0_5, %c0_6] : memref<1x32xf32, #tpu.memory_space<vmem>>, vector<1x32xf32>
    %8 = vector.broadcast %7 : vector<1x32xf32> to vector<8x32xf32>
    %9 = arith.addf %6, %8 : vector<8x32xf32>
    %10 = arith.truncf %9 : vector<8x32xf32> to vector<8x32xbf16>
    %11 = vector.extract_strided_slice %10 {offsets = [0, 0], sizes = [8, 8], strides = [1, 1]} : vector<8x32xbf16> to vector<8x8xbf16>
    %c0_7 = arith.constant 0 : index
    %c0_8 = arith.constant 0 : index
    %12 = vector.load %arg14[%c0_7, %c0_8] : memref<8x32xbf16, #tpu.memory_space<vmem>>, vector<8x8xbf16>
    %cst_9 = arith.constant dense<0.000000e+00> : vector<8x8xf32>
    %13 = tpu.matmul %11, %12, %cst_9 {dimension_numbers = #tpu.dot_dimension_numbers<[1], [1], [0], [0], [0, 0, 1, 0], [], []>} : vector<8x8xbf16>, vector<8x8xbf16>, vector<8x8xf32> -> vector<8x8xf32>
    %cst_10 = arith.constant dense<0xFF800000> : vector<8xf32>
    %14 = vector.multi_reduction <maximumf>, %13, %cst_10 [1] : vector<8x8xf32> to vector<8xf32>
    %15 = vector.shape_cast %14 : vector<8xf32> to vector<8x1xf32>
    %16 = vector.broadcast %15 : vector<8x1xf32> to vector<8x8xf32>
    %17 = arith.subf %13, %16 : vector<8x8xf32>
    %18 = math.exp %17 : vector<8x8xf32>
    %cst_11 = arith.constant dense<0.000000e+00> : vector<8xf32>
    %19 = vector.multi_reduction <add>, %18, %cst_11 [1] : vector<8x8xf32> to vector<8xf32>
    %20 = vector.shape_cast %19 : vector<8xf32> to vector<8x1xf32>
    %21 = tpu.reciprocal %20 {approx = true} : vector<8x1xf32> -> vector<8x1xf32>
    %22 = vector.broadcast %21 : vector<8x1xf32> to vector<8x8xf32>
    %23 = arith.mulf %18, %22 : vector<8x8xf32>
    %24 = arith.truncf %23 : vector<8x8xf32> to vector<8x8xbf16>
    %c0_12 = arith.constant 0 : index
    %c0_13 = arith.constant 0 : index
    %25 = vector.load %arg15[%c0_12, %c0_13] : memref<8x32xbf16, #tpu.memory_space<vmem>>, vector<8x8xbf16>
    %cst_14 = arith.constant dense<0.000000e+00> : vector<8x8xf32>
    %26 = tpu.matmul %24, %25, %cst_14 {dimension_numbers = #tpu.dot_dimension_numbers<[1], [0], [0], [1], [0, 0, 1, 1], [], []>} : vector<8x8xbf16>, vector<8x8xbf16>, vector<8x8xf32> -> vector<8x8xf32>
    %27 = vector.extract_strided_slice %10 {offsets = [0, 8], sizes = [8, 8], strides = [1, 1]} : vector<8x32xbf16> to vector<8x8xbf16>
    %c0_15 = arith.constant 0 : index
    %c8 = arith.constant 8 : index
    %28 = vector.load %arg14[%c0_15, %c8] : memref<8x32xbf16, #tpu.memory_space<vmem>>, vector<8x8xbf16>
    %cst_16 = arith.constant dense<0.000000e+00> : vector<8x8xf32>
    %29 = tpu.matmul %27, %28, %cst_16 {dimension_numbers = #tpu.dot_dimension_numbers<[1], [1], [0], [0], [0, 0, 1, 0], [], []>} : vector<8x8xbf16>, vector<8x8xbf16>, vector<8x8xf32> -> vector<8x8xf32>
    %cst_17 = arith.constant dense<0xFF800000> : vector<8xf32>
    %30 = vector.multi_reduction <maximumf>, %29, %cst_17 [1] : vector<8x8xf32> to vector<8xf32>
    %31 = vector.shape_cast %30 : vector<8xf32> to vector<8x1xf32>
    %32 = vector.broadcast %31 : vector<8x1xf32> to vector<8x8xf32>
    %33 = arith.subf %29, %32 : vector<8x8xf32>
    %34 = math.exp %33 : vector<8x8xf32>
    %cst_18 = arith.constant dense<0.000000e+00> : vector<8xf32>
    %35 = vector.multi_reduction <add>, %34, %cst_18 [1] : vector<8x8xf32> to vector<8xf32>
    %36 = vector.shape_cast %35 : vector<8xf32> to vector<8x1xf32>
    %37 = tpu.reciprocal %36 {approx = true} : vector<8x1xf32> -> vector<8x1xf32>
    %38 = vector.broadcast %37 : vector<8x1xf32> to vector<8x8xf32>
    %39 = arith.mulf %34, %38 : vector<8x8xf32>
    %40 = arith.truncf %39 : vector<8x8xf32> to vector<8x8xbf16>
    %c0_19 = arith.constant 0 : index
    %c8_20 = arith.constant 8 : index
    %41 = vector.load %arg15[%c0_19, %c8_20] : memref<8x32xbf16, #tpu.memory_space<vmem>>, vector<8x8xbf16>
    %cst_21 = arith.constant dense<0.000000e+00> : vector<8x8xf32>
    %42 = tpu.matmul %40, %41, %cst_21 {dimension_numbers = #tpu.dot_dimension_numbers<[1], [0], [0], [1], [0, 0, 1, 1], [], []>} : vector<8x8xbf16>, vector<8x8xbf16>, vector<8x8xf32> -> vector<8x8xf32>
    %43 = vector.extract_strided_slice %10 {offsets = [0, 16], sizes = [8, 8], strides = [1, 1]} : vector<8x32xbf16> to vector<8x8xbf16>
    %c0_22 = arith.constant 0 : index
    %c16 = arith.constant 16 : index
    %44 = vector.load %arg14[%c0_22, %c16] : memref<8x32xbf16, #tpu.memory_space<vmem>>, vector<8x8xbf16>
    %cst_23 = arith.constant dense<0.000000e+00> : vector<8x8xf32>
    %45 = tpu.matmul %43, %44, %cst_23 {dimension_numbers = #tpu.dot_dimension_numbers<[1], [1], [0], [0], [0, 0, 1, 0], [], []>} : vector<8x8xbf16>, vector<8x8xbf16>, vector<8x8xf32> -> vector<8x8xf32>
    %cst_24 = arith.constant dense<0xFF800000> : vector<8xf32>
    %46 = vector.multi_reduction <maximumf>, %45, %cst_24 [1] : vector<8x8xf32> to vector<8xf32>
    %47 = vector.shape_cast %46 : vector<8xf32> to vector<8x1xf32>
    %48 = vector.broadcast %47 : vector<8x1xf32> to vector<8x8xf32>
    %49 = arith.subf %45, %48 : vector<8x8xf32>
    %50 = math.exp %49 : vector<8x8xf32>
    %cst_25 = arith.constant dense<0.000000e+00> : vector<8xf32>
    %51 = vector.multi_reduction <add>, %50, %cst_25 [1] : vector<8x8xf32> to vector<8xf32>
    %52 = vector.shape_cast %51 : vector<8xf32> to vector<8x1xf32>
    %53 = tpu.reciprocal %52 {approx = true} : vector<8x1xf32> -> vector<8x1xf32>
    %54 = vector.broadcast %53 : vector<8x1xf32> to vector<8x8xf32>
    %55 = arith.mulf %50, %54 : vector<8x8xf32>
    %56 = arith.truncf %55 : vector<8x8xf32> to vector<8x8xbf16>
    %c0_26 = arith.constant 0 : index
    %c16_27 = arith.constant 16 : index
    %57 = vector.load %arg15[%c0_26, %c16_27] : memref<8x32xbf16, #tpu.memory_space<vmem>>, vector<8x8xbf16>
    %cst_28 = arith.constant dense<0.000000e+00> : vector<8x8xf32>
    %58 = tpu.matmul %56, %57, %cst_28 {dimension_numbers = #tpu.dot_dimension_numbers<[1], [0], [0], [1], [0, 0, 1, 1], [], []>} : vector<8x8xbf16>, vector<8x8xbf16>, vector<8x8xf32> -> vector<8x8xf32>
    %59 = vector.extract_strided_slice %10 {offsets = [0, 24], sizes = [8, 8], strides = [1, 1]} : vector<8x32xbf16> to vector<8x8xbf16>
    %c0_29 = arith.constant 0 : index
    %c24 = arith.constant 24 : index
    %60 = vector.load %arg14[%c0_29, %c24] : memref<8x32xbf16, #tpu.memory_space<vmem>>, vector<8x8xbf16>
    %cst_30 = arith.constant dense<0.000000e+00> : vector<8x8xf32>
    %61 = tpu.matmul %59, %60, %cst_30 {dimension_numbers = #tpu.dot_dimension_numbers<[1], [1], [0], [0], [0, 0, 1, 0], [], []>} : vector<8x8xbf16>, vector<8x8xbf16>, vector<8x8xf32> -> vector<8x8xf32>
    %cst_31 = arith.constant dense<0xFF800000> : vector<8xf32>
    %62 = vector.multi_reduction <maximumf>, %61, %cst_31 [1] : vector<8x8xf32> to vector<8xf32>
    %63 = vector.shape_cast %62 : vector<8xf32> to vector<8x1xf32>
    %64 = vector.broadcast %63 : vector<8x1xf32> to vector<8x8xf32>
    %65 = arith.subf %61, %64 : vector<8x8xf32>
    %66 = math.exp %65 : vector<8x8xf32>
    %cst_32 = arith.constant dense<0.000000e+00> : vector<8xf32>
    %67 = vector.multi_reduction <add>, %66, %cst_32 [1] : vector<8x8xf32> to vector<8xf32>
    %68 = vector.shape_cast %67 : vector<8xf32> to vector<8x1xf32>
    %69 = tpu.reciprocal %68 {approx = true} : vector<8x1xf32> -> vector<8x1xf32>
    %70 = vector.broadcast %69 : vector<8x1xf32> to vector<8x8xf32>
    %71 = arith.mulf %66, %70 : vector<8x8xf32>
    %72 = arith.truncf %71 : vector<8x8xf32> to vector<8x8xbf16>
    %c0_33 = arith.constant 0 : index
    %c24_34 = arith.constant 24 : index
    %73 = vector.load %arg15[%c0_33, %c24_34] : memref<8x32xbf16, #tpu.memory_space<vmem>>, vector<8x8xbf16>
    %cst_35 = arith.constant dense<0.000000e+00> : vector<8x8xf32>
    %74 = tpu.matmul %72, %73, %cst_35 {dimension_numbers = #tpu.dot_dimension_numbers<[1], [0], [0], [1], [0, 0, 1, 1], [], []>} : vector<8x8xbf16>, vector<8x8xbf16>, vector<8x8xf32> -> vector<8x8xf32>
    %75 = tpu.concatenate %26, %42, %58, %74 in 1 : vector<8x8xf32>, vector<8x8xf32>, vector<8x8xf32>, vector<8x8xf32> -> vector<8x32xf32>
    %76 = arith.truncf %75 : vector<8x32xf32> to vector<8x32xbf16>
    %c0_36 = arith.constant 0 : index
    %c0_37 = arith.constant 0 : index
    %77 = vector.load %arg11[%c0_36, %c0_37] : memref<32x32xbf16, #tpu.memory_space<vmem>>, vector<32x32xbf16>
    %cst_38 = arith.constant dense<0.000000e+00> : vector<8x32xf32>
    %78 = tpu.matmul %76, %77, %cst_38 {dimension_numbers = #tpu.dot_dimension_numbers<[1], [0], [0], [1], [0, 0, 1, 1], [], []>} : vector<8x32xbf16>, vector<32x32xbf16>, vector<8x32xf32> -> vector<8x32xf32>
    %c0_39 = arith.constant 0 : index
    %c0_40 = arith.constant 0 : index
    %79 = vector.load %arg12[%c0_39, %c0_40] : memref<1x32xf32, #tpu.memory_space<vmem>>, vector<1x32xf32>
    %80 = vector.broadcast %79 : vector<1x32xf32> to vector<8x32xf32>
    %81 = arith.addf %78, %80 : vector<8x32xf32>
    %c0_41 = arith.constant 0 : index
    %c0_42 = arith.constant 0 : index
    %c0_43 = arith.constant 0 : index
    %82 = vector.load %arg13[%c0_41, %c0_42, %c0_43] : memref<1x8x32xf32, #tpu.memory_space<vmem>>, vector<1x8x32xf32>
    %83 = vector.shape_cast %82 : vector<1x8x32xf32> to vector<8x32xf32>
    %84 = vector.shape_cast %81 : vector<8x32xf32> to vector<1x8x32xf32>
    tpu.vector_store %arg13[%c0_41, %c0_42, %c0_43], %84 {strides = array<i32>} : memref<1x8x32xf32, #tpu.memory_space<vmem>>, vector<1x8x32xf32>,
    return
  }
  func.func @transform_0(%arg0: i32, %arg1: i32) -> (i32, i32, i32) {
    %c0_i32 = arith.constant 0 : i32
    %c0_i32_0 = arith.constant 0 : i32
    return %arg0, %arg1, %c0_i32 : i32, i32, i32
  }
  func.func @transform_1(%arg0: i32, %arg1: i32) -> (i32, i32, i32) {
    %c0_i32 = arith.constant 0 : i32
    %c0_i32_0 = arith.constant 0 : i32
    %c0_i32_1 = arith.constant 0 : i32
    return %arg0, %c0_i32, %c0_i32_0 : i32, i32, i32
  }
  func.func @transform_2(%arg0: i32, %arg1: i32) -> (i32, i32, i32) {
    %c0_i32 = arith.constant 0 : i32
    %c0_i32_0 = arith.constant 0 : i32
    %c0_i32_1 = arith.constant 0 : i32
    return %arg0, %c0_i32, %c0_i32_0 : i32, i32, i32
  }
  func.func @transform_3(%arg0: i32, %arg1: i32) -> (i32, i32) {
    %c0_i32 = arith.constant 0 : i32
    %c0_i32_0 = arith.constant 0 : i32
    %c0_i32_1 = arith.constant 0 : i32
    return %c0_i32, %c0_i32_0 : i32, i32
  }
  func.func @transform_4(%arg0: i32, %arg1: i32) -> (i32, i32) {
    %c0_i32 = arith.constant 0 : i32
    %c0_i32_0 = arith.constant 0 : i32
    %c0_i32_1 = arith.constant 0 : i32
    return %c0_i32, %c0_i32_0 : i32, i32
  }
  func.func @transform_5(%arg0: i32, %arg1: i32) -> (i32, i32) {
    %c0_i32 = arith.constant 0 : i32
    %c0_i32_0 = arith.constant 0 : i32
    %c0_i32_1 = arith.constant 0 : i32
    return %c0_i32, %c0_i32_0 : i32, i32
  }
  func.func @transform_6(%arg0: i32, %arg1: i32) -> (i32, i32) {
    %c0_i32 = arith.constant 0 : i32
    %c0_i32_0 = arith.constant 0 : i32
    %c0_i32_1 = arith.constant 0 : i32
    return %c0_i32, %c0_i32_0 : i32, i32
  }
  func.func @transform_7(%arg0: i32, %arg1: i32) -> (i32, i32) {
    %c0_i32 = arith.constant 0 : i32
    %c0_i32_0 = arith.constant 0 : i32
    %c0_i32_1 = arith.constant 0 : i32
    return %c0_i32, %c0_i32_0 : i32, i32
  }
  func.func @transform_8(%arg0: i32, %arg1: i32) -> (i32, i32) {
    %c0_i32 = arith.constant 0 : i32
    %c0_i32_0 = arith.constant 0 : i32
    %c0_i32_1 = arith.constant 0 : i32
    return %c0_i32, %c0_i32_0 : i32, i32
  }
  func.func @transform_9(%arg0: i32, %arg1: i32) -> (i32, i32) {
    %c0_i32 = arith.constant 0 : i32
    %c0_i32_0 = arith.constant 0 : i32
    %c0_i32_1 = arith.constant 0 : i32
    return %c0_i32, %c0_i32_0 : i32, i32
  }
  func.func @transform_10(%arg0: i32, %arg1: i32) -> (i32, i32) {
    %c0_i32 = arith.constant 0 : i32
    %c0_i32_0 = arith.constant 0 : i32
    %c0_i32_1 = arith.constant 0 : i32
    return %c0_i32, %c0_i32_0 : i32, i32
  }
  func.func @transform_11(%arg0: i32, %arg1: i32) -> (i32, i32, i32) {
    %c0_i32 = arith.constant 0 : i32
    %c0_i32_0 = arith.constant 0 : i32
    return %arg0, %arg1, %c0_i32 : i32, i32, i32
  }
}

</mosaic_0001>

<llo_original>
// kernel: _lambda_.1
$region0: #{_lambda_.1}
  #allocation0 [shape = 'u32[]', space=smem, size = 0x4, offset = 0x4, fixed_abs, tag = 'smem constant byte address 0x4 - core index']
  #allocation1 [shape = 'u32[144,128]{1,0:T(1,128)}', space=vmem, size = 0x12000, scoped, tag = 'internal scratch']
  #allocation2 [shape = 'bf16[8,32]{1,0:T(8,128)(2,1)}', space=vmem, size = 0x800, scoped, tag = 'scratch operand']
  #allocation3 [shape = 'bf16[8,32]{1,0:T(8,128)(2,1)}', space=vmem, size = 0x800, scoped, tag = 'scratch operand']
  %s0 = inlined_call_operand.vmem [shape: bf16[2,8,32], index: 0, kind: input, shape index: {}]
  %s1 = inlined_call_operand.vmem [shape: bf16[2,8,32], index: 1, kind: input, shape index: {}]
  %s2 = inlined_call_operand.vmem [shape: bf16[2,8,32], index: 2, kind: input, shape index: {}]
  %s3 = inlined_call_operand.vmem [shape: bf16[32,32], index: 3, kind: input, shape index: {}]
  %s4 = inlined_call_operand.vmem [shape: f32[1,32], index: 4, kind: input, shape index: {}]
  %s5 = inlined_call_operand.vmem [shape: bf16[32,32], index: 5, kind: input, shape index: {}]
  %s6 = inlined_call_operand.vmem [shape: f32[1,32], index: 6, kind: input, shape index: {}]
  %s7 = inlined_call_operand.vmem [shape: bf16[32,32], index: 7, kind: input, shape index: {}]
  %s8 = inlined_call_operand.vmem [shape: f32[1,32], index: 8, kind: input, shape index: {}]
  %s9 = inlined_call_operand.vmem [shape: bf16[32,32], index: 9, kind: input, shape index: {}]
  %s10 = inlined_call_operand.vmem [shape: f32[1,32], index: 10, kind: input, shape index: {}]
  %s11 = inlined_call_operand.vmem [shape: f32[2,8,32], index: 11, kind: output, shape index: {}]
  %s12 = sld [smem:[#allocation0]]
  $region81: #{_lambda_.1} parent=0
    _
  %s14 = ssub.s32 1, %s12
  %s15 = scalar_select 0, %s14, %s12
  loop: start=0, step=1, limit=4
  $region2: #{_lambda_.1} parent=0 // loop_pre_header
    _
  $region3: #{_lambda_.1} parent=0 // loop_header
    %s17 = sphi 0, %s21
    %p18 = scmp.ge.s32.totalorder %s17, 4
    %s24 = sphi 0, %s36
    %s25 = sphi 0, %s32
    %s26 = sphi 0, %s24
    %s27 = sphi 0, %s25
    %s28 = sphi 0, %s26
    %s29 = sphi 0, %s27
    %s41 = sphi 0, %s43
    %s44 = sphi 0, %s41
    %s45 = sphi 0, %s44
    %s61 = sphi 0, %s45
    %s67 = sphi 0, %s69
    %s70 = sphi 0, %s67
    %s71 = sphi 0, %s70
    %s87 = sphi 0, %s71
    %s93 = sphi 0, %s95
    %s96 = sphi 0, %s93
    %s97 = sphi 0, %s96
    %s113 = sphi 0, %s97
    %s117 = sphi 0, %s117
    %s119 = sphi 0, %s117
    %s120 = sphi 0, %s119
    %s134 = sphi 0, %s120
    %s138 = sphi 0, %s138
    %s140 = sphi 0, %s138
    %s141 = sphi 0, %s140
    %s155 = sphi 0, %s141
    %s159 = sphi 0, %s159
    %s161 = sphi 0, %s159
    %s162 = sphi 0, %s161
    %s176 = sphi 0, %s162
    %s180 = sphi 0, %s180
    %s182 = sphi 0, %s180
    %s183 = sphi 0, %s182
    %s197 = sphi 0, %s183
    %s201 = sphi 0, %s201
    %s203 = sphi 0, %s201
    %s204 = sphi 0, %s203
    %s218 = sphi 0, %s204
    %s222 = sphi 0, %s222
    %s224 = sphi 0, %s222
    %s225 = sphi 0, %s224
    %s239 = sphi 0, %s225
    %s243 = sphi 0, %s243
    %s245 = sphi 0, %s243
    %s246 = sphi 0, %s245
    %s260 = sphi 0, %s246
    %s264 = sphi 0, %s264
    %s266 = sphi 0, %s264
    %s267 = sphi 0, %s266
    %s281 = sphi 0, %s267
    %s289 = sphi 0, %s291
    %s292 = sphi 0, %s289
    %s293 = sphi 0, %s292
    %s309 = sphi 0, %s293
  $region4: #{_lambda_.1} parent=0 // loop_header_branch
    %20 = sbr.rel (%p18) target = $region8
  $region5: #{_lambda_.1} parent=0 // loop_body
    %s22 = ssub.s32 %s17, 1
    %s23 = ssub.s32 %s17, 2
    %s30 = sadd.s32 1, %s25
    %p31 = scmp.ge.s32.totalorder %s30, 1
    %s32 = scalar_select %p31, 0, %s30
    %s33 = sadd.s32 1, %s24
    %s34 = scalar_select %p31, %s33, %s24
    %p35 = scmp.ge.s32.totalorder %s34, 2
    %s36 = scalar_select %p35, 0, %s34
    %s37 = ssub.s32 %s24, %s36
    %s38 = ssub.s32 %s25, %s32
    %s39 = sor.u32 %s37, %s38
    %p40 = scmp.eq.s32.totalorder %s39, 0
    %s42 = sadd.s32 %s41, 1
    %s43 = scalar_select %p40, %s41, %s42
    %p46 = pneg %p40
    %p47 = scmp.eq.s32.totalorder %s17, 1
    %p48 = por %p46, %p47
    %p49 = scmp.ne.s32.totalorder %s41, %s44
    %p50 = scmp.eq.s32.totalorder %s17, 0
    %p51 = por %p49, %p50
    %p52 = scmp.ne.s32.totalorder %s41, %s44
    %p53 = scmp.eq.s32.totalorder %s22, 1
    %p54 = por %p52, %p53
    %p55 = scmp.ne.s32.totalorder %s44, %s45
    %p56 = scmp.eq.s32.totalorder %s22, 0
    %p57 = por %p55, %p56
    %p58 = scmp.ne.s32.totalorder %s44, %s45
    %p59 = scmp.eq.s32.totalorder %s23, 1
    %p60 = por %p58, %p59
    %p62 = scmp.ne.s32.totalorder %s45, %s61
    %p63 = scmp.eq.s32.totalorder %s23, 0
    %p64 = por %p62, %p63
    %s65 = ssub.s32 %s24, %s36
    %p66 = scmp.eq.s32.totalorder %s65, 0
    %s68 = sadd.s32 %s67, 1
    %s69 = scalar_select %p66, %s67, %s68
    %p72 = pneg %p66
    %p73 = scmp.eq.s32.totalorder %s17, 1
    %p74 = por %p72, %p73
    %p75 = scmp.ne.s32.totalorder %s67, %s70
    %p76 = scmp.eq.s32.totalorder %s17, 0
    %p77 = por %p75, %p76
    %p78 = scmp.ne.s32.totalorder %s67, %s70
    %p79 = scmp.eq.s32.totalorder %s22, 1
    %p80 = por %p78, %p79
    %p81 = scmp.ne.s32.totalorder %s70, %s71
    %p82 = scmp.eq.s32.totalorder %s22, 0
    %p83 = por %p81, %p82
    %p84 = scmp.ne.s32.totalorder %s70, %s71
    %p85 = scmp.eq.s32.totalorder %s23, 1
    %p86 = por %p84, %p85
    %p88 = scmp.ne.s32.totalorder %s71, %s87
    %p89 = scmp.eq.s32.totalorder %s23, 0
    %p90 = por %p88, %p89
    %s91 = ssub.s32 %s24, %s36
    %p92 = scmp.eq.s32.totalorder %s91, 0
    %s94 = sadd.s32 %s93, 1
    %s95 = scalar_select %p92, %s93, %s94
    %p98 = pneg %p92
    %p99 = scmp.eq.s32.totalorder %s17, 1
    %p100 = por %p98, %p99
    %p101 = scmp.ne.s32.totalorder %s93, %s96
    %p102 = scmp.eq.s32.totalorder %s17, 0
    %p103 = por %p101, %p102
    %p104 = scmp.ne.s32.totalorder %s93, %s96
    %p105 = scmp.eq.s32.totalorder %s22, 1
    %p106 = por %p104, %p105
    %p107 = scmp.ne.s32.totalorder %s96, %s97
    %p108 = scmp.eq.s32.totalorder %s22, 0
    %p109 = por %p107, %p108
    %p110 = scmp.ne.s32.totalorder %s96, %s97
    %p111 = scmp.eq.s32.totalorder %s23, 1
    %p112 = por %p110, %p111
    %p114 = scmp.ne.s32.totalorder %s97, %s113
    %p115 = scmp.eq.s32.totalorder %s23, 0
    %p116 = por %p114, %p115
    %s118 = sadd.s32 %s117, 1
    %p121 = scmp.eq.s32.totalorder %s17, 1
    %p122 = scmp.ne.s32.totalorder %s117, %s119
    %p123 = scmp.eq.s32.totalorder %s17, 0
    %p124 = por %p122, %p123
    %p125 = scmp.ne.s32.totalorder %s117, %s119
    %p126 = scmp.eq.s32.totalorder %s22, 1
    %p127 = por %p125, %p126
    %p128 = scmp.ne.s32.totalorder %s119, %s120
    %p129 = scmp.eq.s32.totalorder %s22, 0
    %p130 = por %p128, %p129
    %p131 = scmp.ne.s32.totalorder %s119, %s120
    %p132 = scmp.eq.s32.totalorder %s23, 1
    %p133 = por %p131, %p132
    %p135 = scmp.ne.s32.totalorder %s120, %s134
    %p136 = scmp.eq.s32.totalorder %s23, 0
    %p137 = por %p135, %p136
    %s139 = sadd.s32 %s138, 1
    %p142 = scmp.eq.s32.totalorder %s17, 1
    %p143 = scmp.ne.s32.totalorder %s138, %s140
    %p144 = scmp.eq.s32.totalorder %s17, 0
    %p145 = por %p143, %p144
    %p146 = scmp.ne.s32.totalorder %s138, %s140
    %p147 = scmp.eq.s32.totalorder %s22, 1
    %p148 = por %p146, %p147
    %p149 = scmp.ne.s32.totalorder %s140, %s141
    %p150 = scmp.eq.s32.totalorder %s22, 0
    %p151 = por %p149, %p150
    %p152 = scmp.ne.s32.totalorder %s140, %s141
    %p153 = scmp.eq.s32.totalorder %s23, 1
    %p154 = por %p152, %p153
    %p156 = scmp.ne.s32.totalorder %s141, %s155
    %p157 = scmp.eq.s32.totalorder %s23, 0
    %p158 = por %p156, %p157
    %s160 = sadd.s32 %s159, 1
    %p163 = scmp.eq.s32.totalorder %s17, 1
    %p164 = scmp.ne.s32.totalorder %s159, %s161
    %p165 = scmp.eq.s32.totalorder %s17, 0
    %p166 = por %p164, %p165
    %p167 = scmp.ne.s32.totalorder %s159, %s161
    %p168 = scmp.eq.s32.totalorder %s22, 1
    %p169 = por %p167, %p168
    %p170 = scmp.ne.s32.totalorder %s161, %s162
    %p171 = scmp.eq.s32.totalorder %s22, 0
    %p172 = por %p170, %p171
    %p173 = scmp.ne.s32.totalorder %s161, %s162
    %p174 = scmp.eq.s32.totalorder %s23, 1
    %p175 = por %p173, %p174
    %p177 = scmp.ne.s32.totalorder %s162, %s176
    %p178 = scmp.eq.s32.totalorder %s23, 0
    %p179 = por %p177, %p178
    %s181 = sadd.s32 %s180, 1
    %p184 = scmp.eq.s32.totalorder %s17, 1
    %p185 = scmp.ne.s32.totalorder %s180, %s182
    %p186 = scmp.eq.s32.totalorder %s17, 0
    %p187 = por %p185, %p186
    %p188 = scmp.ne.s32.totalorder %s180, %s182
    %p189 = scmp.eq.s32.totalorder %s22, 1
    %p190 = por %p188, %p189
    %p191 = scmp.ne.s32.totalorder %s182, %s183
    %p192 = scmp.eq.s32.totalorder %s22, 0
    %p193 = por %p191, %p192
    %p194 = scmp.ne.s32.totalorder %s182, %s183
    %p195 = scmp.eq.s32.totalorder %s23, 1
    %p196 = por %p194, %p195
    %p198 = scmp.ne.s32.totalorder %s183, %s197
    %p199 = scmp.eq.s32.totalorder %s23, 0
    %p200 = por %p198, %p199
    %s202 = sadd.s32 %s201, 1
    %p205 = scmp.eq.s32.totalorder %s17, 1
    %p206 = scmp.ne.s32.totalorder %s201, %s203
    %p207 = scmp.eq.s32.totalorder %s17, 0
    %p208 = por %p206, %p207
    %p209 = scmp.ne.s32.totalorder %s201, %s203
    %p210 = scmp.eq.s32.totalorder %s22, 1
    %p211 = por %p209, %p210
    %p212 = scmp.ne.s32.totalorder %s203, %s204
    %p213 = scmp.eq.s32.totalorder %s22, 0
    %p214 = por %p212, %p213
    %p215 = scmp.ne.s32.totalorder %s203, %s204
    %p216 = scmp.eq.s32.totalorder %s23, 1
    %p217 = por %p215, %p216
    %p219 = scmp.ne.s32.totalorder %s204, %s218
    %p220 = scmp.eq.s32.totalorder %s23, 0
    %p221 = por %p219, %p220
    %s223 = sadd.s32 %s222, 1
    %p226 = scmp.eq.s32.totalorder %s17, 1
    %p227 = scmp.ne.s32.totalorder %s222, %s224
    %p228 = scmp.eq.s32.totalorder %s17, 0
    %p229 = por %p227, %p228
    %p230 = scmp.ne.s32.totalorder %s222, %s224
    %p231 = scmp.eq.s32.totalorder %s22, 1
    %p232 = por %p230, %p231
    %p233 = scmp.ne.s32.totalorder %s224, %s225
    %p234 = scmp.eq.s32.totalorder %s22, 0
    %p235 = por %p233, %p234
    %p236 = scmp.ne.s32.totalorder %s224, %s225
    %p237 = scmp.eq.s32.totalorder %s23, 1
    %p238 = por %p236, %p237
    %p240 = scmp.ne.s32.totalorder %s225, %s239
    %p241 = scmp.eq.s32.totalorder %s23, 0
    %p242 = por %p240, %p241
    %s244 = sadd.s32 %s243, 1
    %p247 = scmp.eq.s32.totalorder %s17, 1
    %p248 = scmp.ne.s32.totalorder %s243, %s245
    %p249 = scmp.eq.s32.totalorder %s17, 0
    %p250 = por %p248, %p249
    %p251 = scmp.ne.s32.totalorder %s243, %s245
    %p252 = scmp.eq.s32.totalorder %s22, 1
    %p253 = por %p251, %p252
    %p254 = scmp.ne.s32.totalorder %s245, %s246
    %p255 = scmp.eq.s32.totalorder %s22, 0
    %p256 = por %p254, %p255
    %p257 = scmp.ne.s32.totalorder %s245, %s246
    %p258 = scmp.eq.s32.totalorder %s23, 1
    %p259 = por %p257, %p258
    %p261 = scmp.ne.s32.totalorder %s246, %s260
    %p262 = scmp.eq.s32.totalorder %s23, 0
    %p263 = por %p261, %p262
    %s265 = sadd.s32 %s264, 1
    %p268 = scmp.eq.s32.totalorder %s17, 1
    %p269 = scmp.ne.s32.totalorder %s264, %s266
    %p270 = scmp.eq.s32.totalorder %s17, 0
    %p271 = por %p269, %p270
    %p272 = scmp.ne.s32.totalorder %s264, %s266
    %p273 = scmp.eq.s32.totalorder %s22, 1
    %p274 = por %p272, %p273
    %p275 = scmp.ne.s32.totalorder %s266, %s267
    %p276 = scmp.eq.s32.totalorder %s22, 0
    %p277 = por %p275, %p276
    %p278 = scmp.ne.s32.totalorder %s266, %s267
    %p279 = scmp.eq.s32.totalorder %s23, 1
    %p280 = por %p278, %p279
    %p282 = scmp.ne.s32.totalorder %s267, %s281
    %p283 = scmp.eq.s32.totalorder %s23, 0
    %p284 = por %p282, %p283
    %s285 = ssub.s32 %s24, %s36
    %s286 = ssub.s32 %s25, %s32
    %s287 = sor.u32 %s285, %s286
    %p288 = scmp.eq.s32.totalorder %s287, 0
    %s290 = sadd.s32 %s289, 1
    %s291 = scalar_select %p288, %s289, %s290
    %p294 = pneg %p288
    %p295 = scmp.eq.s32.totalorder %s17, 1
    %p296 = por %p294, %p295
    %p297 = scmp.ne.s32.totalorder %s289, %s292
    %p298 = scmp.eq.s32.totalorder %s17, 0
    %p299 = por %p297, %p298
    %p300 = scmp.ne.s32.totalorder %s289, %s292
    %p301 = scmp.eq.s32.totalorder %s22, 1
    %p302 = por %p300, %p301
    %p303 = scmp.ne.s32.totalorder %s292, %s293
    %p304 = scmp.eq.s32.totalorder %s22, 0
    %p305 = por %p303, %p304
    %p306 = scmp.ne.s32.totalorder %s292, %s293
    %p307 = scmp.eq.s32.totalorder %s23, 1
    %p308 = por %p306, %p307
    %p310 = scmp.ne.s32.totalorder %s293, %s309
    %p311 = scmp.eq.s32.totalorder %s23, 0
    %p312 = por %p310, %p311
    %p313 = scmp.le.s32.totalorder 1, %s17
    %p314 = scmp.lt.s32.totalorder %s17, 3
    %p315 = pnand %p313, %p314
    %p316 = pneg %p315
    // Predicated region
    $region9: #{_lambda_.1} parent=5 // pred_check
      _
    $region10: #{_lambda_.1} parent=5 // pred_check_branch
      %318 = sbr.rel (%p315) target = $region12
    $region11: #{_lambda_.1} parent=5 // pred_region
      %s319 = ssub.s32 %s17, 1
      // Predicated region
      $region13: #{_lambda_.1} parent=11 // pred_check
        %p320 = pneg %p130
      $region14: #{_lambda_.1} parent=11 // pred_check_branch
        %322 = sbr.rel (%p320) target = $region16
      $region15: #{_lambda_.1} parent=11 // pred_region
        _
      $region16: #{_lambda_.1} parent=11 // pred_fallthru
        _
      // Predicated region
      $region17: #{_lambda_.1} parent=11 // pred_check
        %p323 = pneg %p151
      $region18: #{_lambda_.1} parent=11 // pred_check_branch
        %325 = sbr.rel (%p323) target = $region20
      $region19: #{_lambda_.1} parent=11 // pred_region
        _
      $region20: #{_lambda_.1} parent=11 // pred_fallthru
        _
      // Predicated region
      $region21: #{_lambda_.1} parent=11 // pred_check
        %p326 = pneg %p172
      $region22: #{_lambda_.1} parent=11 // pred_check_branch
        %328 = sbr.rel (%p326) target = $region24
      $region23: #{_lambda_.1} parent=11 // pred_region
        _
      $region24: #{_lambda_.1} parent=11 // pred_fallthru
        _
      // Predicated region
      $region25: #{_lambda_.1} parent=11 // pred_check
        %p329 = pneg %p193
      $region26: #{_lambda_.1} parent=11 // pred_check_branch
        %331 = sbr.rel (%p329) target = $region28
      $region27: #{_lambda_.1} parent=11 // pred_region
        _
      $region28: #{_lambda_.1} parent=11 // pred_fallthru
        _
      // Predicated region
      $region29: #{_lambda_.1} parent=11 // pred_check
        %p332 = pneg %p214
      $region30: #{_lambda_.1} parent=11 // pred_check_branch
        %334 = sbr.rel (%p332) target = $region32
      $region31: #{_lambda_.1} parent=11 // pred_region
        _
      $region32: #{_lambda_.1} parent=11 // pred_fallthru
        _
      // Predicated region
      $region33: #{_lambda_.1} parent=11 // pred_check
        %p335 = pneg %p235
      $region34: #{_lambda_.1} parent=11 // pred_check_branch
        %337 = sbr.rel (%p335) target = $region36
      $region35: #{_lambda_.1} parent=11 // pred_region
        _
      $region36: #{_lambda_.1} parent=11 // pred_fallthru
        _
      // Predicated region
      $region37: #{_lambda_.1} parent=11 // pred_check
        %p338 = pneg %p256
      $region38: #{_lambda_.1} parent=11 // pred_check_branch
        %340 = sbr.rel (%p338) target = $region40
      $region39: #{_lambda_.1} parent=11 // pred_region
        _
      $region40: #{_lambda_.1} parent=11 // pred_fallthru
        _
      // Predicated region
      $region41: #{_lambda_.1} parent=11 // pred_check
        %p341 = pneg %p277
      $region42: #{_lambda_.1} parent=11 // pred_check_branch
        %343 = sbr.rel (%p341) target = $region44
      $region43: #{_lambda_.1} parent=11 // pred_region
        _
      $region44: #{_lambda_.1} parent=11 // pred_fallthru
        _
    $region12: #{_lambda_.1} parent=5 // pred_fallthru
      _
    %p344 = scmp.lt.s32.totalorder %s17, 2
    // Predicated region
    $region45: #{_lambda_.1} parent=5 // pred_check
      %p345 = pneg %p344
    $region46: #{_lambda_.1} parent=5 // pred_check_branch
      %347 = sbr.rel (%p345) target = $region48
    $region47: #{_lambda_.1} parent=5 // pred_region
      // Predicated region
      $region49: #{_lambda_.1} parent=47 // pred_check
        %p348 = pneg %p51
      $region50: #{_lambda_.1} parent=47 // pred_check_branch
        %350 = sbr.rel (%p348) target = $region52
      $region51: #{_lambda_.1} parent=47 // pred_region
        %p351 = scmp.lt.s32.totalorder %s24, 1
        %s352 = scalar_select %p351, %s24, 1
        %p353 = scmp.lt.s32.totalorder %s25, 0
        %s354 = scalar_select %p353, %s25, 0
        %s355 = sadd.s32 %s354, %s352
        %s356 = smul.addr %s355, 4
        %s357 = scalar_lea.vmem %s0, %s356
      $region52: #{_lambda_.1} parent=47 // pred_fallthru
        _
      // Predicated region
      $region53: #{_lambda_.1} parent=47 // pred_check
        %p358 = pneg %p77
      $region54: #{_lambda_.1} parent=47 // pred_check_branch
        %360 = sbr.rel (%p358) target = $region56
      $region55: #{_lambda_.1} parent=47 // pred_region
        %p361 = scmp.lt.s32.totalorder %s24, 1
        %s362 = scalar_select %p361, %s24, 1
        %s363 = smul.addr %s362, 4
        %s364 = scalar_lea.vmem %s1, %s363
      $region56: #{_lambda_.1} parent=47 // pred_fallthru
        _
      // Predicated region
      $region57: #{_lambda_.1} parent=47 // pred_check
        %p365 = pneg %p103
      $region58: #{_lambda_.1} parent=47 // pred_check_branch
        %367 = sbr.rel (%p365) target = $region60
      $region59: #{_lambda_.1} parent=47 // pred_region
        %p368 = scmp.lt.s32.totalorder %s24, 1
        %s369 = scalar_select %p368, %s24, 1
        %s370 = smul.addr %s369, 4
        %s371 = scalar_lea.vmem %s2, %s370
      $region60: #{_lambda_.1} parent=47 // pred_fallthru
        _
    $region48: #{_lambda_.1} parent=5 // pred_fallthru
      _
    %p372 = scmp.le.s32.totalorder 1, %s17
    %p373 = scmp.lt.s32.totalorder %s17, 3
    %p374 = pnand %p372, %p373
    %p375 = pneg %p374
    // Predicated region
    $region61: #{_lambda_.1} parent=5 // pred_check
      _
    $region62: #{_lambda_.1} parent=5 // pred_check_branch
      %377 = sbr.rel (%p374) target = $region64
    $region63: #{_lambda_.1} parent=5 // pred_region
      %s378 = ssub.s32 %s17, 1
      %p379 = scmp.lt.s32.totalorder %s26, 1
      %s380 = scalar_select %p379, %s26, 1
      %p381 = scmp.lt.s32.totalorder %s27, 0
      %s382 = scalar_select %p381, %s27, 0
      %s383 = sadd.s32 %s382, %s380
      %s384 = smul.addr %s383, 4
      %s385 = scalar_lea.vmem %s0, %s384
      %p386 = pneg %p57
      %p387 = pneg %p54
      %p388 = scmp.lt.s32.totalorder %s26, 1
      %s389 = scalar_select %p388, %s26, 1
      %s390 = smul.addr %s389, 4
      %s391 = scalar_lea.vmem %s1, %s390
      %p392 = pneg %p83
      %p393 = pneg %p80
      %p394 = scmp.lt.s32.totalorder %s26, 1
      %s395 = scalar_select %p394, %s26, 1
      %s396 = smul.addr %s395, 4
      %s397 = scalar_lea.vmem %s2, %s396
      %p398 = pneg %p109
      %p399 = pneg %p106
      %p400 = pneg %p130
      %p401 = pneg %p127
      %p402 = pneg %p151
      %p403 = pneg %p148
      %p404 = pneg %p172
      %p405 = pneg %p169
      %p406 = pneg %p193
      %p407 = pneg %p190
      %p408 = pneg %p214
      %p409 = pneg %p211
      %p410 = pneg %p235
      %p411 = pneg %p232
      %p412 = pneg %p256
      %p413 = pneg %p253
      %p414 = pneg %p277
      %p415 = pneg %p274
      %p416 = pneg %p305
      %p417 = pneg %p302
      %p418 = scmp.lt.s32.totalorder %s26, 1
      %s419 = scalar_select %p418, %s26, 1
      %p420 = scmp.lt.s32.totalorder %s27, 0
      %s421 = scalar_select %p420, %s27, 0
      %s422 = sadd.s32 %s421, %s419
      %s423 = smul.addr %s422, 8
      %s424 = scalar_lea.vmem %s11, %s423
      %p425 = scmp.lt.s32.totalorder %s26, 1
      %s426 = scalar_select %p425, %s26, 1
      %p427 = scmp.lt.s32.totalorder %s27, 0
      %s428 = scalar_select %p427, %s27, 0
      %s429 = sadd.s32 %s428, %s426
      %s430 = smul.addr %s429, 4
      %s431 = scalar_lea.vmem %s0, %s430
      %p432 = scmp.lt.s32.totalorder %s26, 1
      %s433 = scalar_select %p432, %s26, 1
      %s434 = smul.addr %s433, 4
      %s435 = scalar_lea.vmem %s1, %s434
      %p436 = scmp.lt.s32.totalorder %s26, 1
      %s437 = scalar_select %p436, %s26, 1
      %s438 = smul.addr %s437, 4
      %s439 = scalar_lea.vmem %s2, %s438
      %p440 = scmp.lt.s32.totalorder %s26, 1
      %s441 = scalar_select %p440, %s26, 1
      %p442 = scmp.lt.s32.totalorder %s27, 0
      %s443 = scalar_select %p442, %s27, 0
      %s444 = sadd.s32 %s443, %s441
      %s445 = smul.addr %s444, 8
      %s446 = scalar_lea.vmem %s11, %s445
      %p448 = scmp.eq.s32.totalorder %s27, 0
      // Predicated region
      $region65: #{_lambda_.1} parent=63 // pred_check
        %p449 = pneg %p448
      $region66: #{_lambda_.1} parent=63 // pred_check_branch
        %451 = sbr.rel (%p449) target = $region68
      $region67: #{_lambda_.1} parent=63 // pred_region
        %v452 = vld [vmem:[%s435] sm:$0xf]
        %v453 = vld [vmem:[%s5] sm:$0xf]
        %v454 = vld [vmem:[%s5 + $0x4] sm:$0xf]
        %v455 = vld [vmem:[%s5 + $0x8] sm:$0xf]
        %v456 = vld [vmem:[%s5 + $0xc] sm:$0xf]
        %v457 = vld [vmem:[%s6] sm:$0x1]
        %v459 = vlaneseq
        %v460 = vshrl.u32 %v459, 7
        %v461 = vsub.s32 0, %v460
        %v462 = vrot.slane %v457, %v461
        %v468 = vunpack.c.l.b16 %v453
        %v469 = vunpack.c.l.b16 %v454
        %v470 = vunpack.c.l.b16 %v455
        %v471 = vunpack.c.l.b16 %v456
        %v472 = vpack.c.b16 %v469, %v468
        %v473 = vpack.c.b16 %v471, %v470
        %vm476 = vcmask 261120
        %v478 = vsel %vm476, %v452, 0
        %480 = vmatprep.subr.bf16.mxu0 0
        %481 = vmatpush1.bf16.msra.mxu0 %v472
        %482 = vmatprep.subr.bf16.mxu0 0
        %483 = vmatpush1.bf16.msra.mxu0 %v473
        %484 = vmatprep.subr.bf16.mxu0 0
        %485 = vmatpush1.bf16.msra.mxu0 0
        %486 = vmatprep.subr.bf16.mxu0 0
        %487 = vmatpush1.bf16.msra.mxu0 0
        %488 = vmatprep.subr.bf16.mxu0 0
        %489 = vmatpush1.bf16.msra.mxu0 0
        %490 = vmatprep.subr.bf16.mxu0 0
        %491 = vmatpush1.bf16.msra.mxu0 0
        %492 = vmatprep.subr.bf16.mxu0 0
        %493 = vmatpush1.bf16.msra.mxu0 0
        %494 = vmatprep.subr.bf16.mxu0 0
        %495 = vmatpush1.bf16.msra.mxu0 0
        %496 = vmatprep.subr.bf16.mxu0 0
        %497 = vmatpush1.bf16.msra.mxu0 0
        %498 = vmatprep.subr.bf16.mxu0 0
        %499 = vmatpush1.bf16.msra.mxu0 0
        %500 = vmatprep.subr.bf16.mxu0 0
        %501 = vmatpush1.bf16.msra.mxu0 0
        %502 = vmatprep.subr.bf16.mxu0 0
        %503 = vmatpush1.bf16.msra.mxu0 0
        %504 = vmatprep.subr.bf16.mxu0 0
        %505 = vmatpush1.bf16.msra.mxu0 0
        %506 = vmatprep.subr.bf16.mxu0 0
        %507 = vmatpush1.bf16.msra.mxu0 0
        %508 = vmatprep.subr.bf16.mxu0 0
        %509 = vmatpush1.bf16.msra.mxu0 0
        %510 = vmatprep.subr.bf16.mxu0 0
        %511 = vmatpush1.bf16.msra.mxu0 0
        %512 = vmatprep.mubr.bf16.mxu0 0
        %513 = vmatmul.mubr.bf16.gmra.mrb[0].mxu0 %v478
        %v514 = vpop.f32.mrb[0].mxu0
        %v515 = vadd.f32 %v462, %v514
        %v516 = vpop.f32.mrb[0].mxu0
        %v517 = vpop.f32.mrb[0].mxu0
        %v518 = vpop.f32.mrb[0].mxu0
        %519 = vdwg.mxu0
        %v520 = vpack.c.bf16 %v515, %v515
        %vm521 = vcmask 257024
        %522 = vst.msk [vmem:[#allocation2] sm:$0xf] %vm521, %v520
        %v523 = vld [vmem:[%s439] sm:$0xf]
        %v524 = vld [vmem:[%s7] sm:$0xf]
        %v525 = vld [vmem:[%s7 + $0x4] sm:$0xf]
        %v526 = vld [vmem:[%s7 + $0x8] sm:$0xf]
        %v527 = vld [vmem:[%s7 + $0xc] sm:$0xf]
        %v528 = vld [vmem:[%s8] sm:$0x1]
        %v530 = vlaneseq
        %v531 = vshrl.u32 %v530, 7
        %v532 = vsub.s32 0, %v531
        %v533 = vrot.slane %v528, %v532
        %v539 = vunpack.c.l.b16 %v524
        %v540 = vunpack.c.l.b16 %v525
        %v541 = vunpack.c.l.b16 %v526
        %v542 = vunpack.c.l.b16 %v527
        %v543 = vpack.c.b16 %v540, %v539
        %v544 = vpack.c.b16 %v542, %v541
        %v548 = vsel %vm476, %v523, 0
        %550 = vmatprep.subr.bf16.mxu0 0
        %551 = vmatpush1.bf16.msra.mxu0 %v543
        %552 = vmatprep.subr.bf16.mxu0 0
        %553 = vmatpush1.bf16.msra.mxu0 %v544
        %554 = vmatprep.subr.bf16.mxu0 0
        %555 = vmatpush1.bf16.msra.mxu0 0
        %556 = vmatprep.subr.bf16.mxu0 0
        %557 = vmatpush1.bf16.msra.mxu0 0
        %558 = vmatprep.subr.bf16.mxu0 0
        %559 = vmatpush1.bf16.msra.mxu0 0
        %560 = vmatprep.subr.bf16.mxu0 0
        %561 = vmatpush1.bf16.msra.mxu0 0
        %562 = vmatprep.subr.bf16.mxu0 0
        %563 = vmatpush1.bf16.msra.mxu0 0
        %564 = vmatprep.subr.bf16.mxu0 0
        %565 = vmatpush1.bf16.msra.mxu0 0
        %566 = vmatprep.subr.bf16.mxu0 0
        %567 = vmatpush1.bf16.msra.mxu0 0
        %568 = vmatprep.subr.bf16.mxu0 0
        %569 = vmatpush1.bf16.msra.mxu0 0
        %570 = vmatprep.subr.bf16.mxu0 0
        %571 = vmatpush1.bf16.msra.mxu0 0
        %572 = vmatprep.subr.bf16.mxu0 0
        %573 = vmatpush1.bf16.msra.mxu0 0
        %574 = vmatprep.subr.bf16.mxu0 0
        %575 = vmatpush1.bf16.msra.mxu0 0
        %576 = vmatprep.subr.bf16.mxu0 0
        %577 = vmatpush1.bf16.msra.mxu0 0
        %578 = vmatprep.subr.bf16.mxu0 0
        %579 = vmatpush1.bf16.msra.mxu0 0
        %580 = vmatprep.subr.bf16.mxu0 0
        %581 = vmatpush1.bf16.msra.mxu0 0
        %582 = vmatprep.mubr.bf16.mxu0 0
        %583 = vmatmul.mubr.bf16.gmra.mrb[0].mxu0 %v548
        %v584 = vpop.f32.mrb[0].mxu0
        %v585 = vadd.f32 %v533, %v584
        %v586 = vpop.f32.mrb[0].mxu0
        %v587 = vpop.f32.mrb[0].mxu0
        %v588 = vpop.f32.mrb[0].mxu0
        %589 = vdwg.mxu0
        %v590 = vpack.c.bf16 %v585, %v585
        %591 = vst.msk [vmem:[#allocation3] sm:$0xf] %vm521, %v590
      $region68: #{_lambda_.1} parent=63 // pred_fallthru
        _
      %v592 = vld [vmem:[%s431] sm:$0xf]
      %v593 = vld [vmem:[%s3] sm:$0xf]
      %v594 = vld [vmem:[%s3 + $0x4] sm:$0xf]
      %v595 = vld [vmem:[%s3 + $0x8] sm:$0xf]
      %v596 = vld [vmem:[%s3 + $0xc] sm:$0xf]
      %v597 = vld [vmem:[%s4] sm:$0x1]
      %v599 = vlaneseq
      %v600 = vshrl.u32 %v599, 7
      %v601 = vsub.s32 0, %v600
      %v602 = vrot.slane %v597, %v601
      %v608 = vunpack.c.l.b16 %v593
      %v609 = vunpack.c.l.b16 %v594
      %v610 = vunpack.c.l.b16 %v595
      %v611 = vunpack.c.l.b16 %v596
      %v612 = vpack.c.b16 %v609, %v608
      %v613 = vpack.c.b16 %v611, %v610
      %vm616 = vcmask 261120
      %v618 = vsel %vm616, %v592, 0
      %620 = vmatprep.subr.bf16.mxu0 0
      %621 = vmatpush1.bf16.msra.mxu0 %v612
      %622 = vmatprep.subr.bf16.mxu0 0
      %623 = vmatpush1.bf16.msra.mxu0 %v613
      %624 = vmatprep.subr.bf16.mxu0 0
      %625 = vmatpush1.bf16.msra.mxu0 0
      %626 = vmatprep.subr.bf16.mxu0 0
      %627 = vmatpush1.bf16.msra.mxu0 0
      %628 = vmatprep.subr.bf16.mxu0 0
      %629 = vmatpush1.bf16.msra.mxu0 0
      %630 = vmatprep.subr.bf16.mxu0 0
      %631 = vmatpush1.bf16.msra.mxu0 0
      %632 = vmatprep.subr.bf16.mxu0 0
      %633 = vmatpush1.bf16.msra.mxu0 0
      %634 = vmatprep.subr.bf16.mxu0 0
      %635 = vmatpush1.bf16.msra.mxu0 0
      %636 = vmatprep.subr.bf16.mxu0 0
      %637 = vmatpush1.bf16.msra.mxu0 0
      %638 = vmatprep.subr.bf16.mxu0 0
      %639 = vmatpush1.bf16.msra.mxu0 0
      %640 = vmatprep.subr.bf16.mxu0 0
      %641 = vmatpush1.bf16.msra.mxu0 0
      %642 = vmatprep.subr.bf16.mxu0 0
      %643 = vmatpush1.bf16.msra.mxu0 0
      %644 = vmatprep.subr.bf16.mxu0 0
      %645 = vmatpush1.bf16.msra.mxu0 0
      %646 = vmatprep.subr.bf16.mxu0 0
      %647 = vmatpush1.bf16.msra.mxu0 0
      %648 = vmatprep.subr.bf16.mxu0 0
      %649 = vmatpush1.bf16.msra.mxu0 0
      %650 = vmatprep.subr.bf16.mxu0 0
      %651 = vmatpush1.bf16.msra.mxu0 0
      %652 = vmatprep.mubr.bf16.mxu0 0
      %653 = vmatmul.mubr.bf16.gmra.mrb[0].mxu0 %v618
      %v654 = vpop.f32.mrb[0].mxu0
      %v655 = vadd.f32 %v602, %v654
      %v656 = vpop.f32.mrb[0].mxu0
      %v657 = vpop.f32.mrb[0].mxu0
      %v658 = vpop.f32.mrb[0].mxu0
      %659 = vdwg.mxu0
      %v660 = vpack.c.bf16 %v655, %v655
      %v661 = vld [vmem:[#allocation2] sm:$0xf]
      %vm662 = vcmask 64512
      %v664 = vsel %vm662, %v660, 0
      %v667 = vsel %vm662, %v661, 0
      %669 = vmatprep.subr.bf16.mxu0 0
      %670 = vmatpush1.bf16.xpose.msra.mxu0 %v667
      %671 = vmatprep.subr.bf16.mxu0 0
      %672 = vmatpush1.bf16.xpose.msra.mxu0 0
      %673 = vmatprep.subr.bf16.mxu0 0
      %674 = vmatpush1.bf16.xpose.msra.mxu0 0
      %675 = vmatprep.subr.bf16.mxu0 0
      %676 = vmatpush1.bf16.xpose.msra.mxu0 0
      %677 = vmatprep.subr.bf16.mxu0 0
      %678 = vmatpush1.bf16.xpose.msra.mxu0 0
      %679 = vmatprep.subr.bf16.mxu0 0
      %680 = vmatpush1.bf16.xpose.msra.mxu0 0
      %681 = vmatprep.subr.bf16.mxu0 0
      %682 = vmatpush1.bf16.xpose.msra.mxu0 0
      %683 = vmatprep.subr.bf16.mxu0 0
      %684 = vmatpush1.bf16.xpose.msra.mxu0 0
      %685 = vmatprep.subr.bf16.mxu0 0
      %686 = vmatpush1.bf16.xpose.msra.mxu0 0
      %687 = vmatprep.subr.bf16.mxu0 0
      %688 = vmatpush1.bf16.xpose.msra.mxu0 0
      %689 = vmatprep.subr.bf16.mxu0 0
      %690 = vmatpush1.bf16.xpose.msra.mxu0 0
      %691 = vmatprep.subr.bf16.mxu0 0
      %692 = vmatpush1.bf16.xpose.msra.mxu0 0
      %693 = vmatprep.subr.bf16.mxu0 0
      %694 = vmatpush1.bf16.xpose.msra.mxu0 0
      %695 = vmatprep.subr.bf16.mxu0 0
      %696 = vmatpush1.bf16.xpose.msra.mxu0 0
      %697 = vmatprep.subr.bf16.mxu0 0
      %698 = vmatpush1.bf16.xpose.msra.mxu0 0
      %699 = vmatprep.subr.bf16.mxu0 0
      %700 = vmatpush1.bf16.xpose.msra.mxu0 0
      %701 = vmatprep.mubr.bf16.mxu0 0
      %702 = vmatmul.mubr.bf16.gmra.mrb[0].mxu0 %v664
      %v703 = vpop.f32.mrb[0].mxu0
      %v704 = vadd.f32 0.0, %v703
      %v705 = vpop.f32.mrb[0].mxu0
      %v706 = vpop.f32.mrb[0].mxu0
      %v707 = vpop.f32.mrb[0].mxu0
      %708 = vdwg.mxu0
      %v709 = vsel %vm662, %v704, -inf
      %710 = vmax.xlane.f32.xlu0 %v709
      %v711 = vpop.xlane.xlu0 %710
      %v712 = vsub.f32 %v704, %v711
      %v713 = vmul.f32 %v712, 1.442695
      %v714 = vpow.pop %v713
      %v715 = vsel %vm662, %v714, 0.0
      %716 = vadd.xlane.f32.xlu0 %v715
      %v717 = vpop.xlane.xlu0 %716
      %v718 = vrcp.pop %v717
      %v719 = vmul.f32 %v714, %v718
      %v720 = vpack.c.bf16 %v719, %v719
      %v721 = vld [vmem:[#allocation3] sm:$0xf]
      %v723 = vsel %vm662, %v720, 0
      %vm725 = vcmask 1043456
      %v727 = vsel %vm725, %v721, 0
      %729 = vmatprep.subr.bf16.mxu0 0
      %730 = vmatpush1.bf16.msra.mxu0 %v727
      %731 = vmatprep.subr.bf16.mxu0 0
      %732 = vmatpush1.bf16.msra.mxu0 0
      %733 = vmatprep.subr.bf16.mxu0 0
      %734 = vmatpush1.bf16.msra.mxu0 0
      %735 = vmatprep.subr.bf16.mxu0 0
      %736 = vmatpush1.bf16.msra.mxu0 0
      %737 = vmatprep.subr.bf16.mxu0 0
      %738 = vmatpush1.bf16.msra.mxu0 0
      %739 = vmatprep.subr.bf16.mxu0 0
      %740 = vmatpush1.bf16.msra.mxu0 0
      %741 = vmatprep.subr.bf16.mxu0 0
      %742 = vmatpush1.bf16.msra.mxu0 0
      %743 = vmatprep.subr.bf16.mxu0 0
      %744 = vmatpush1.bf16.msra.mxu0 0
      %745 = vmatprep.subr.bf16.mxu0 0
      %746 = vmatpush1.bf16.msra.mxu0 0
      %747 = vmatprep.subr.bf16.mxu0 0
      %748 = vmatpush1.bf16.msra.mxu0 0
      %749 = vmatprep.subr.bf16.mxu0 0
      %750 = vmatpush1.bf16.msra.mxu0 0
      %751 = vmatprep.subr.bf16.mxu0 0
      %752 = vmatpush1.bf16.msra.mxu0 0
      %753 = vmatprep.subr.bf16.mxu0 0
      %754 = vmatpush1.bf16.msra.mxu0 0
      %755 = vmatprep.subr.bf16.mxu0 0
      %756 = vmatpush1.bf16.msra.mxu0 0
      %757 = vmatprep.subr.bf16.mxu0 0
      %758 = vmatpush1.bf16.msra.mxu0 0
      %759 = vmatprep.subr.bf16.mxu0 0
      %760 = vmatpush1.bf16.msra.mxu0 0
      %761 = vmatprep.mubr.bf16.mxu0 0
      %762 = vmatmul.mubr.bf16.gmra.mrb[0].mxu0 %v723
      %v763 = vpop.f32.mrb[0].mxu0
      %v764 = vadd.f32 0.0, %v763
      %v765 = vpop.f32.mrb[0].mxu0
      %v766 = vpop.f32.mrb[0].mxu0
      %v767 = vpop.f32.mrb[0].mxu0
      %768 = vdwg.mxu0
      %770 = vrot.lane.b32.xlu0 %v660, 120
      %v771 = vpop.permute.xlu0 %770
      %v773 = vunpack.c.l.b16 %v661
      %v774 = vpack.c.b16 %v773, %v773
      %775 = vrot.lane.b32.xlu0 %v774, 120
      %v776 = vpop.permute.xlu0 %775
      %v778 = vsel %vm662, %v771, 0
      %v781 = vsel %vm662, %v776, 0
      %783 = vmatprep.subr.bf16.mxu0 0
      %784 = vmatpush1.bf16.xpose.msra.mxu0 %v781
      %785 = vmatprep.subr.bf16.mxu0 0
      %786 = vmatpush1.bf16.xpose.msra.mxu0 0
      %787 = vmatprep.subr.bf16.mxu0 0
      %788 = vmatpush1.bf16.xpose.msra.mxu0 0
      %789 = vmatprep.subr.bf16.mxu0 0
      %790 = vmatpush1.bf16.xpose.msra.mxu0 0
      %791 = vmatprep.subr.bf16.mxu0 0
      %792 = vmatpush1.bf16.xpose.msra.mxu0 0
      %793 = vmatprep.subr.bf16.mxu0 0
      %794 = vmatpush1.bf16.xpose.msra.mxu0 0
      %795 = vmatprep.subr.bf16.mxu0 0
      %796 = vmatpush1.bf16.xpose.msra.mxu0 0
      %797 = vmatprep.subr.bf16.mxu0 0
      %798 = vmatpush1.bf16.xpose.msra.mxu0 0
      %799 = vmatprep.subr.bf16.mxu0 0
      %800 = vmatpush1.bf16.xpose.msra.mxu0 0
      %801 = vmatprep.subr.bf16.mxu0 0
      %802 = vmatpush1.bf16.xpose.msra.mxu0 0
      %803 = vmatprep.subr.bf16.mxu0 0
      %804 = vmatpush1.bf16.xpose.msra.mxu0 0
      %805 = vmatprep.subr.bf16.mxu0 0
      %806 = vmatpush1.bf16.xpose.msra.mxu0 0
      %807 = vmatprep.subr.bf16.mxu0 0
      %808 = vmatpush1.bf16.xpose.msra.mxu0 0
      %809 = vmatprep.subr.bf16.mxu0 0
      %810 = vmatpush1.bf16.xpose.msra.mxu0 0
      %811 = vmatprep.subr.bf16.mxu0 0
      %812 = vmatpush1.bf16.xpose.msra.mxu0 0
      %813 = vmatprep.subr.bf16.mxu0 0
      %814 = vmatpush1.bf16.xpose.msra.mxu0 0
      %815 = vmatprep.mubr.bf16.mxu0 0
      %816 = vmatmul.mubr.bf16.gmra.mrb[0].mxu0 %v778
      %v817 = vpop.f32.mrb[0].mxu0
      %v818 = vadd.f32 0.0, %v817
      %v819 = vpop.f32.mrb[0].mxu0
      %v820 = vpop.f32.mrb[0].mxu0
      %v821 = vpop.f32.mrb[0].mxu0
      %822 = vdwg.mxu0
      %v823 = vsel %vm662, %v818, -inf
      %824 = vmax.xlane.f32.xlu0 %v823
      %v825 = vpop.xlane.xlu0 %824
      %v826 = vsub.f32 %v818, %v825
      %v827 = vmul.f32 %v826, 1.442695
      %v828 = vpow.pop %v827
      %v829 = vsel %vm662, %v828, 0.0
      %830 = vadd.xlane.f32.xlu0 %v829
      %v831 = vpop.xlane.xlu0 %830
      %v832 = vrcp.pop %v831
      %v833 = vmul.f32 %v828, %v832
      %v834 = vpack.c.bf16 %v833, %v833
      %v836 = vunpack.c.l.b16 %v721
      %v837 = vpack.c.b16 %v836, %v836
      %838 = vrot.lane.b32.xlu0 %v837, 120
      %v839 = vpop.permute.xlu0 %838
      %v841 = vsel %vm662, %v834, 0
      %v844 = vsel %vm725, %v839, 0
      %846 = vmatprep.subr.bf16.mxu0 0
      %847 = vmatpush1.bf16.msra.mxu0 %v844
      %848 = vmatprep.subr.bf16.mxu0 0
      %849 = vmatpush1.bf16.msra.mxu0 0
      %850 = vmatprep.subr.bf16.mxu0 0
      %851 = vmatpush1.bf16.msra.mxu0 0
      %852 = vmatprep.subr.bf16.mxu0 0
      %853 = vmatpush1.bf16.msra.mxu0 0
      %854 = vmatprep.subr.bf16.mxu0 0
      %855 = vmatpush1.bf16.msra.mxu0 0
      %856 = vmatprep.subr.bf16.mxu0 0
      %857 = vmatpush1.bf16.msra.mxu0 0
      %858 = vmatprep.subr.bf16.mxu0 0
      %859 = vmatpush1.bf16.msra.mxu0 0
      %860 = vmatprep.subr.bf16.mxu0 0
      %861 = vmatpush1.bf16.msra.mxu0 0
      %862 = vmatprep.subr.bf16.mxu0 0
      %863 = vmatpush1.bf16.msra.mxu0 0
      %864 = vmatprep.subr.bf16.mxu0 0
      %865 = vmatpush1.bf16.msra.mxu0 0
      %866 = vmatprep.subr.bf16.mxu0 0
      %867 = vmatpush1.bf16.msra.mxu0 0
      %868 = vmatprep.subr.bf16.mxu0 0
      %869 = vmatpush1.bf16.msra.mxu0 0
      %870 = vmatprep.subr.bf16.mxu0 0
      %871 = vmatpush1.bf16.msra.mxu0 0
      %872 = vmatprep.subr.bf16.mxu0 0
      %873 = vmatpush1.bf16.msra.mxu0 0
      %874 = vmatprep.subr.bf16.mxu0 0
      %875 = vmatpush1.bf16.msra.mxu0 0
      %876 = vmatprep.subr.bf16.mxu0 0
      %877 = vmatpush1.bf16.msra.mxu0 0
      %878 = vmatprep.mubr.bf16.mxu0 0
      %879 = vmatmul.mubr.bf16.gmra.mrb[0].mxu0 %v841
      %v880 = vpop.f32.mrb[0].mxu0
      %v881 = vadd.f32 0.0, %v880
      %v882 = vpop.f32.mrb[0].mxu0
      %v883 = vpop.f32.mrb[0].mxu0
      %v884 = vpop.f32.mrb[0].mxu0
      %885 = vdwg.mxu0
      %886 = vrot.lane.b32.xlu0 %v660, 112
      %v887 = vpop.permute.xlu0 %886
      %888 = vrot.lane.b32.xlu0 %v774, 112
      %v889 = vpop.permute.xlu0 %888
      %v891 = vsel %vm662, %v887, 0
      %v894 = vsel %vm662, %v889, 0
      %896 = vmatprep.subr.bf16.mxu0 0
      %897 = vmatpush1.bf16.xpose.msra.mxu0 %v894
      %898 = vmatprep.subr.bf16.mxu0 0
      %899 = vmatpush1.bf16.xpose.msra.mxu0 0
      %900 = vmatprep.subr.bf16.mxu0 0
      %901 = vmatpush1.bf16.xpose.msra.mxu0 0
      %902 = vmatprep.subr.bf16.mxu0 0
      %903 = vmatpush1.bf16.xpose.msra.mxu0 0
      %904 = vmatprep.subr.bf16.mxu0 0
      %905 = vmatpush1.bf16.xpose.msra.mxu0 0
      %906 = vmatprep.subr.bf16.mxu0 0
      %907 = vmatpush1.bf16.xpose.msra.mxu0 0
      %908 = vmatprep.subr.bf16.mxu0 0
      %909 = vmatpush1.bf16.xpose.msra.mxu0 0
      %910 = vmatprep.subr.bf16.mxu0 0
      %911 = vmatpush1.bf16.xpose.msra.mxu0 0
      %912 = vmatprep.subr.bf16.mxu0 0
      %913 = vmatpush1.bf16.xpose.msra.mxu0 0
      %914 = vmatprep.subr.bf16.mxu0 0
      %915 = vmatpush1.bf16.xpose.msra.mxu0 0
      %916 = vmatprep.subr.bf16.mxu0 0
      %917 = vmatpush1.bf16.xpose.msra.mxu0 0
      %918 = vmatprep.subr.bf16.mxu0 0
      %919 = vmatpush1.bf16.xpose.msra.mxu0 0
      %920 = vmatprep.subr.bf16.mxu0 0
      %921 = vmatpush1.bf16.xpose.msra.mxu0 0
      %922 = vmatprep.subr.bf16.mxu0 0
      %923 = vmatpush1.bf16.xpose.msra.mxu0 0
      %924 = vmatprep.subr.bf16.mxu0 0
      %925 = vmatpush1.bf16.xpose.msra.mxu0 0
      %926 = vmatprep.subr.bf16.mxu0 0
      %927 = vmatpush1.bf16.xpose.msra.mxu0 0
      %928 = vmatprep.mubr.bf16.mxu0 0
      %929 = vmatmul.mubr.bf16.gmra.mrb[0].mxu0 %v891
      %v930 = vpop.f32.mrb[0].mxu0
      %v931 = vadd.f32 0.0, %v930
      %v932 = vpop.f32.mrb[0].mxu0
      %v933 = vpop.f32.mrb[0].mxu0
      %v934 = vpop.f32.mrb[0].mxu0
      %935 = vdwg.mxu0
      %v936 = vsel %vm662, %v931, -inf
      %937 = vmax.xlane.f32.xlu0 %v936
      %v938 = vpop.xlane.xlu0 %937
      %v939 = vsub.f32 %v931, %v938
      %v940 = vmul.f32 %v939, 1.442695
      %v941 = vpow.pop %v940
      %v942 = vsel %vm662, %v941, 0.0
      %943 = vadd.xlane.f32.xlu0 %v942
      %v944 = vpop.xlane.xlu0 %943
      %v945 = vrcp.pop %v944
      %v946 = vmul.f32 %v941, %v945
      %v947 = vpack.c.bf16 %v946, %v946
      %948 = vrot.lane.b32.xlu0 %v837, 112
      %v949 = vpop.permute.xlu0 %948
      %v951 = vsel %vm662, %v947, 0
      %v954 = vsel %vm725, %v949, 0
      %956 = vmatprep.subr.bf16.mxu0 0
      %957 = vmatpush1.bf16.msra.mxu0 %v954
      %958 = vmatprep.subr.bf16.mxu0 0
      %959 = vmatpush1.bf16.msra.mxu0 0
      %960 = vmatprep.subr.bf16.mxu0 0
      %961 = vmatpush1.bf16.msra.mxu0 0
      %962 = vmatprep.subr.bf16.mxu0 0
      %963 = vmatpush1.bf16.msra.mxu0 0
      %964 = vmatprep.subr.bf16.mxu0 0
      %965 = vmatpush1.bf16.msra.mxu0 0
      %966 = vmatprep.subr.bf16.mxu0 0
      %967 = vmatpush1.bf16.msra.mxu0 0
      %968 = vmatprep.subr.bf16.mxu0 0
      %969 = vmatpush1.bf16.msra.mxu0 0
      %970 = vmatprep.subr.bf16.mxu0 0
      %971 = vmatpush1.bf16.msra.mxu0 0
      %972 = vmatprep.subr.bf16.mxu0 0
      %973 = vmatpush1.bf16.msra.mxu0 0
      %974 = vmatprep.subr.bf16.mxu0 0
      %975 = vmatpush1.bf16.msra.mxu0 0
      %976 = vmatprep.subr.bf16.mxu0 0
      %977 = vmatpush1.bf16.msra.mxu0 0
      %978 = vmatprep.subr.bf16.mxu0 0
      %979 = vmatpush1.bf16.msra.mxu0 0
      %980 = vmatprep.subr.bf16.mxu0 0
      %981 = vmatpush1.bf16.msra.mxu0 0
      %982 = vmatprep.subr.bf16.mxu0 0
      %983 = vmatpush1.bf16.msra.mxu0 0
      %984 = vmatprep.subr.bf16.mxu0 0
      %985 = vmatpush1.bf16.msra.mxu0 0
      %986 = vmatprep.subr.bf16.mxu0 0
      %987 = vmatpush1.bf16.msra.mxu0 0
      %988 = vmatprep.mubr.bf16.mxu0 0
      %989 = vmatmul.mubr.bf16.gmra.mrb[0].mxu0 %v951
      %v990 = vpop.f32.mrb[0].mxu0
      %v991 = vadd.f32 0.0, %v990
      %v992 = vpop.f32.mrb[0].mxu0
      %v993 = vpop.f32.mrb[0].mxu0
      %v994 = vpop.f32.mrb[0].mxu0
      %995 = vdwg.mxu0
      %996 = vrot.lane.b32.xlu0 %v660, 104
      %v997 = vpop.permute.xlu0 %996
      %998 = vrot.lane.b32.xlu0 %v774, 104
      %v999 = vpop.permute.xlu0 %998
      %v1001 = vsel %vm662, %v997, 0
      %v1004 = vsel %vm662, %v999, 0
      %1006 = vmatprep.subr.bf16.mxu0 0
      %1007 = vmatpush1.bf16.xpose.msra.mxu0 %v1004
      %1008 = vmatprep.subr.bf16.mxu0 0
      %1009 = vmatpush1.bf16.xpose.msra.mxu0 0
      %1010 = vmatprep.subr.bf16.mxu0 0
      %1011 = vmatpush1.bf16.xpose.msra.mxu0 0
      %1012 = vmatprep.subr.bf16.mxu0 0
      %1013 = vmatpush1.bf16.xpose.msra.mxu0 0
      %1014 = vmatprep.subr.bf16.mxu0 0
      %1015 = vmatpush1.bf16.xpose.msra.mxu0 0
      %1016 = vmatprep.subr.bf16.mxu0 0
      %1017 = vmatpush1.bf16.xpose.msra.mxu0 0
      %1018 = vmatprep.subr.bf16.mxu0 0
      %1019 = vmatpush1.bf16.xpose.msra.mxu0 0
      %1020 = vmatprep.subr.bf16.mxu0 0
      %1021 = vmatpush1.bf16.xpose.msra.mxu0 0
      %1022 = vmatprep.subr.bf16.mxu0 0
      %1023 = vmatpush1.bf16.xpose.msra.mxu0 0
      %1024 = vmatprep.subr.bf16.mxu0 0
      %1025 = vmatpush1.bf16.xpose.msra.mxu0 0
      %1026 = vmatprep.subr.bf16.mxu0 0
      %1027 = vmatpush1.bf16.xpose.msra.mxu0 0
      %1028 = vmatprep.subr.bf16.mxu0 0
      %1029 = vmatpush1.bf16.xpose.msra.mxu0 0
      %1030 = vmatprep.subr.bf16.mxu0 0
      %1031 = vmatpush1.bf16.xpose.msra.mxu0 0
      %1032 = vmatprep.subr.bf16.mxu0 0
      %1033 = vmatpush1.bf16.xpose.msra.mxu0 0
      %1034 = vmatprep.subr.bf16.mxu0 0
      %1035 = vmatpush1.bf16.xpose.msra.mxu0 0
      %1036 = vmatprep.subr.bf16.mxu0 0
      %1037 = vmatpush1.bf16.xpose.msra.mxu0 0
      %1038 = vmatprep.mubr.bf16.mxu0 0
      %1039 = vmatmul.mubr.bf16.gmra.mrb[0].mxu0 %v1001
      %v1040 = vpop.f32.mrb[0].mxu0
      %v1041 = vadd.f32 0.0, %v1040
      %v1042 = vpop.f32.mrb[0].mxu0
      %v1043 = vpop.f32.mrb[0].mxu0
      %v1044 = vpop.f32.mrb[0].mxu0
      %1045 = vdwg.mxu0
      %v1046 = vsel %vm662, %v1041, -inf
      %1047 = vmax.xlane.f32.xlu0 %v1046
      %v1048 = vpop.xlane.xlu0 %1047
      %v1049 = vsub.f32 %v1041, %v1048
      %v1050 = vmul.f32 %v1049, 1.442695
      %v1051 = vpow.pop %v1050
      %v1052 = vsel %vm662, %v1051, 0.0
      %1053 = vadd.xlane.f32.xlu0 %v1052
      %v1054 = vpop.xlane.xlu0 %1053
      %v1055 = vrcp.pop %v1054
      %v1056 = vmul.f32 %v1051, %v1055
      %v1057 = vpack.c.bf16 %v1056, %v1056
      %1058 = vrot.lane.b32.xlu0 %v837, 104
      %v1059 = vpop.permute.xlu0 %1058
      %v1061 = vsel %vm662, %v1057, 0
      %v1064 = vsel %vm725, %v1059, 0
      %1066 = vmatprep.subr.bf16.mxu0 0
      %1067 = vmatpush1.bf16.msra.mxu0 %v1064
      %1068 = vmatprep.subr.bf16.mxu0 0
      %1069 = vmatpush1.bf16.msra.mxu0 0
      %1070 = vmatprep.subr.bf16.mxu0 0
      %1071 = vmatpush1.bf16.msra.mxu0 0
      %1072 = vmatprep.subr.bf16.mxu0 0
      %1073 = vmatpush1.bf16.msra.mxu0 0
      %1074 = vmatprep.subr.bf16.mxu0 0
      %1075 = vmatpush1.bf16.msra.mxu0 0
      %1076 = vmatprep.subr.bf16.mxu0 0
      %1077 = vmatpush1.bf16.msra.mxu0 0
      %1078 = vmatprep.subr.bf16.mxu0 0
      %1079 = vmatpush1.bf16.msra.mxu0 0
      %1080 = vmatprep.subr.bf16.mxu0 0
      %1081 = vmatpush1.bf16.msra.mxu0 0
      %1082 = vmatprep.subr.bf16.mxu0 0
      %1083 = vmatpush1.bf16.msra.mxu0 0
      %1084 = vmatprep.subr.bf16.mxu0 0
      %1085 = vmatpush1.bf16.msra.mxu0 0
      %1086 = vmatprep.subr.bf16.mxu0 0
      %1087 = vmatpush1.bf16.msra.mxu0 0
      %1088 = vmatprep.subr.bf16.mxu0 0
      %1089 = vmatpush1.bf16.msra.mxu0 0
      %1090 = vmatprep.subr.bf16.mxu0 0
      %1091 = vmatpush1.bf16.msra.mxu0 0
      %1092 = vmatprep.subr.bf16.mxu0 0
      %1093 = vmatpush1.bf16.msra.mxu0 0
      %1094 = vmatprep.subr.bf16.mxu0 0
      %1095 = vmatpush1.bf16.msra.mxu0 0
      %1096 = vmatprep.subr.bf16.mxu0 0
      %1097 = vmatpush1.bf16.msra.mxu0 0
      %1098 = vmatprep.mubr.bf16.mxu0 0
      %1099 = vmatmul.mubr.bf16.gmra.mrb[0].mxu0 %v1061
      %v1100 = vpop.f32.mrb[0].mxu0
      %v1101 = vadd.f32 0.0, %v1100
      %v1102 = vpop.f32.mrb[0].mxu0
      %v1103 = vpop.f32.mrb[0].mxu0
      %v1104 = vpop.f32.mrb[0].mxu0
      %1105 = vdwg.mxu0
      %1107 = vrot.lane.b32.xlu0 %v881, 8
      %v1108 = vpop.permute.xlu0 %1107
      %1111 = vrot.lane.b32.xlu0 %v991, 16
      %v1112 = vpop.permute.xlu0 %1111
      %1115 = vrot.lane.b32.xlu0 %v1101, 24
      %v1116 = vpop.permute.xlu0 %1115
      %v1118 = vsel %vm662, %v764, %v1108
      %vm1119 = vcmask 130048
      %v1120 = vsel %vm1119, %v1118, %v1112
      %vm1121 = vcmask 195584
      %v1122 = vsel %vm1121, %v1120, %v1116
      %v1123 = vpack.c.bf16 %v1122, %v1122
      %v1124 = vld [vmem:[%s9] sm:$0xf]
      %v1125 = vld [vmem:[%s9 + $0x4] sm:$0xf]
      %v1126 = vld [vmem:[%s9 + $0x8] sm:$0xf]
      %v1127 = vld [vmem:[%s9 + $0xc] sm:$0xf]
      %v1128 = vld [vmem:[%s10] sm:$0x1]
      %v1130 = vlaneseq
      %v1131 = vshrl.u32 %v1130, 7
      %v1132 = vsub.s32 0, %v1131
      %v1133 = vrot.slane %v1128, %v1132
      %v1139 = vunpack.c.l.b16 %v1124
      %v1140 = vunpack.c.l.b16 %v1125
      %v1141 = vunpack.c.l.b16 %v1126
      %v1142 = vunpack.c.l.b16 %v1127
      %v1143 = vpack.c.b16 %v1140, %v1139
      %v1144 = vpack.c.b16 %v1142, %v1141
      %v1148 = vsel %vm616, %v1123, 0
      %1150 = vmatprep.subr.bf16.mxu0 0
      %1151 = vmatpush1.bf16.msra.mxu0 %v1143
      %1152 = vmatprep.subr.bf16.mxu0 0
      %1153 = vmatpush1.bf16.msra.mxu0 %v1144
      %1154 = vmatprep.subr.bf16.mxu0 0
      %1155 = vmatpush1.bf16.msra.mxu0 0
      %1156 = vmatprep.subr.bf16.mxu0 0
      %1157 = vmatpush1.bf16.msra.mxu0 0
      %1158 = vmatprep.subr.bf16.mxu0 0
      %1159 = vmatpush1.bf16.msra.mxu0 0
      %1160 = vmatprep.subr.bf16.mxu0 0
      %1161 = vmatpush1.bf16.msra.mxu0 0
      %1162 = vmatprep.subr.bf16.mxu0 0
      %1163 = vmatpush1.bf16.msra.mxu0 0
      %1164 = vmatprep.subr.bf16.mxu0 0
      %1165 = vmatpush1.bf16.msra.mxu0 0
      %1166 = vmatprep.subr.bf16.mxu0 0
      %1167 = vmatpush1.bf16.msra.mxu0 0
      %1168 = vmatprep.subr.bf16.mxu0 0
      %1169 = vmatpush1.bf16.msra.mxu0 0
      %1170 = vmatprep.subr.bf16.mxu0 0
      %1171 = vmatpush1.bf16.msra.mxu0 0
      %1172 = vmatprep.subr.bf16.mxu0 0
      %1173 = vmatpush1.bf16.msra.mxu0 0
      %1174 = vmatprep.subr.bf16.mxu0 0
      %1175 = vmatpush1.bf16.msra.mxu0 0
      %1176 = vmatprep.subr.bf16.mxu0 0
      %1177 = vmatpush1.bf16.msra.mxu0 0
      %1178 = vmatprep.subr.bf16.mxu0 0
      %1179 = vmatpush1.bf16.msra.mxu0 0
      %1180 = vmatprep.subr.bf16.mxu0 0
      %1181 = vmatpush1.bf16.msra.mxu0 0
      %1182 = vmatprep.mubr.bf16.mxu0 0
      %1183 = vmatmul.mubr.bf16.gmra.mrb[0].mxu0 %v1148
      %v1184 = vpop.f32.mrb[0].mxu0
      %v1185 = vadd.f32 %v1133, %v1184
      %v1186 = vpop.f32.mrb[0].mxu0
      %v1187 = vpop.f32.mrb[0].mxu0
      %v1188 = vpop.f32.mrb[0].mxu0
      %1189 = vdwg.mxu0
      %1190 = vst.msk [vmem:[%s446] sm:$0xff] %vm616, %v1185
      %p1191 = scmp.lt.s32.totalorder %s26, 1
      %s1192 = scalar_select %p1191, %s26, 1
      %p1193 = scmp.lt.s32.totalorder %s27, 0
      %s1194 = scalar_select %p1193, %s27, 0
      %s1195 = sadd.s32 %s1194, %s1192
      %s1196 = smul.addr %s1195, 8
      %s1197 = scalar_lea.vmem %s11, %s1196
      // Predicated region
      $region69: #{_lambda_.1} parent=63 // pred_check
        %p1198 = pneg %p302
      $region70: #{_lambda_.1} parent=63 // pred_check_branch
        %1200 = sbr.rel (%p1198) target = $region72
      $region71: #{_lambda_.1} parent=63 // pred_region
        _
      $region72: #{_lambda_.1} parent=63 // pred_fallthru
        _
    $region64: #{_lambda_.1} parent=5 // pred_fallthru
      _
    %p1201 = scmp.le.s32.totalorder 2, %s17
    // Predicated region
    $region73: #{_lambda_.1} parent=5 // pred_check
      %p1202 = pneg %p1201
    $region74: #{_lambda_.1} parent=5 // pred_check_branch
      %1204 = sbr.rel (%p1202) target = $region76
    $region75: #{_lambda_.1} parent=5 // pred_region
      %s1205 = ssub.s32 %s17, 2
      // Predicated region
      $region77: #{_lambda_.1} parent=75 // pred_check
        %p1206 = pneg %p308
      $region78: #{_lambda_.1} parent=75 // pred_check_branch
        %1208 = sbr.rel (%p1206) target = $region80
      $region79: #{_lambda_.1} parent=75 // pred_region
        %p1209 = scmp.lt.s32.totalorder %s28, 1
        %s1210 = scalar_select %p1209, %s28, 1
        %p1211 = scmp.lt.s32.totalorder %s29, 0
        %s1212 = scalar_select %p1211, %s29, 0
        %s1213 = sadd.s32 %s1212, %s1210
        %s1214 = smul.addr %s1213, 8
        %s1215 = scalar_lea.vmem %s11, %s1214
      $region80: #{_lambda_.1} parent=75 // pred_fallthru
        _
    $region76: #{_lambda_.1} parent=5 // pred_fallthru
      _
  $region6: #{_lambda_.1} parent=0 // loop_footer
    %s21 = sadd.s32 1, %s17
  $region7: #{_lambda_.1} parent=0 // loop_footer_branch
    %16 = sbr.rel target = $region3
  $region8: #{_lambda_.1} parent=0 // loop_exit
    _

</llo_original>
